<compile_context>
chip_gen: v7x
topology: tpu7x:2x2x1
jax: 0.10.0
libtpu: 0.0.40
codegen_flags: <defaults>
</compile_context>

<pallas_src>
import functools

import jax
import jax.numpy as jnp
from jax.experimental import pallas as pl
from jax.experimental.pallas import tpu as pltpu


def lstm_skeleton_kernel(feat_ref, len_ref, sel_ref, wenc_ref, benc_ref,
                         wih_ref, whh_ref, b_ref, out_ref, *,
                         conf_threshold, timesteps):
    T = timesteps
    TB, _ = feat_ref.shape                 # (T*Bp, 3K), time-major rows
    Bp = TB // T
    B, H = out_ref.shape                   # real batch, hidden

    # ---------- batched preprocessing (all timesteps at once) ----------
    f = feat_ref[...]                      # (T*Bp, 3K) = [x0, y0, c0, x1, y1, c1, ...]
    # Align every keypoint's confidence with its x/y lanes via a 0/1 selection
    # matmul (conf lanes map to 0, so they are gated off automatically).
    conf_xy = jnp.dot(f, sel_ref[...], preferred_element_type=jnp.float32)
    gated = jnp.where(conf_xy > conf_threshold, f, 0.0)

    # Encoder: Linear (conf rows of the stacked weight are zero) + Dropout(eval
    # -> identity) + ReLU.  bf16 MXU operands, f32 accumulate.
    enc = jnp.dot(gated.astype(jnp.bfloat16), wenc_ref[...],
                  preferred_element_type=jnp.float32) + benc_ref[...]
    enc = jnp.maximum(enc, 0.0)                                        # (T*Bp, E)

    # Input-to-hidden projection for every timestep, bias folded in.
    gx = jnp.dot(enc.astype(jnp.bfloat16), wih_ref[...],
                 preferred_element_type=jnp.float32) + b_ref[...]      # (T*Bp, 4H)

    # ---------- loop invariants, read once ----------
    whh = whh_ref[...]                     # (H, 4H) bf16, g-columns pre-doubled
    len_col = len_ref[...]                 # (Bp, 1) f32 lengths (0 for pad rows)

    h = jnp.zeros((Bp, H), jnp.float32)
    c = jnp.zeros((Bp, H), jnp.float32)
    acc = jnp.zeros((Bp, H), jnp.float32)

    # ---------- recurrence: fully unrolled; only h @ W_hh + gates per step ----------
    for t in range(T):
        gates = gx[t * Bp:(t + 1) * Bp, :] + jnp.dot(
            h.astype(jnp.bfloat16), whh, preferred_element_type=jnp.float32)
        # Single EUP sigmoid over the whole 4H slab; the cell-gate columns were
        # pre-doubled so tanh(g) = 2*sigmoid(2g) - 1 needs only VPU work.
        sig = jax.nn.sigmoid(gates)
        i_g = sig[:, 0 * H:1 * H]
        f_g = sig[:, 1 * H:2 * H]
        g_g = 2.0 * sig[:, 2 * H:3 * H] - 1.0
        o_g = sig[:, 3 * H:4 * H]
        c_new = f_g * c + i_g * g_g
        h_new = o_g * jnp.tanh(c_new)
        # packed-sequence semantics: freeze state / drop outputs past length
        v = jnp.float32(t) < len_col                                   # (Bp, 1)
        h = jnp.where(v, h_new, h)
        c = jnp.where(v, c_new, c)
        acc = acc + jnp.where(v, h_new, 0.0)

    # lstm_pooling == 'sum': sum over valid timesteps / length.  Padded rows
    # have length 0 (guarded to 1); real lengths are >= 1 (pack_padded_sequence
    # requirement), so real rows match the reference exactly.
    inv_len = pl.reciprocal(jnp.maximum(len_col, 1.0), approx=True)
    out_ref[...] = (acc * inv_len)[:B, :]


def lstm_skeleton_forward(features, lengths, params, conf_threshold):
    """features: (B, T, K, 3) float32, lengths: (B,) int -> (B, H) float32."""
    B, T, K, _ = features.shape
    H = params["whh"].shape[0]
    E = params["wih"].shape[0]

    # Pad batch to a multiple of 8 (sublane granularity).  Padded rows get
    # length 0, so they are never valid and never contribute.
    Bp = ((B + 7) // 8) * 8
    feats = features.astype(jnp.float32)
    lens = lengths.astype(jnp.float32)
    if Bp != B:
        feats = jnp.pad(feats, ((0, Bp - B), (0, 0), (0, 0), (0, 0)))
        lens = jnp.pad(lens, ((0, Bp - B),))
    # Time-major rows; the trailing (K, 3) -> 3K flatten is layout-preserving.
    feat_tm = jnp.transpose(feats, (1, 0, 2, 3)).reshape(T * Bp, 3 * K)
    len_col = lens.reshape(Bp, 1)

    kernel = functools.partial(lstm_skeleton_kernel,
                               conf_threshold=conf_threshold, timesteps=T)
    vmem = pl.BlockSpec(memory_space=pltpu.MemorySpace.VMEM)

    operands = (feat_tm, len_col, params["sel"], params["wenc3"],
                params["benc"], params["wih_k"], params["whh_k"], params["b_k"])
    bytes_accessed = int(sum(op.size * op.dtype.itemsize for op in operands)
                         + B * H * 4)
    flops = int(2 * T * Bp * (3 * K * 3 * K + 3 * K * E + E * 4 * H + H * 4 * H))
    transcendentals = int(T * Bp * (4 * H + H))

    return pl.pallas_call(
        kernel,
        out_shape=jax.ShapeDtypeStruct((B, H), jnp.float32),
        in_specs=[vmem] * len(operands),
        out_specs=vmem,
        compiler_params=pltpu.CompilerParams(
            # allow the residual pad/transpose (features) and length prep to be
            # fused into the pallas_call operands
            allow_input_fusion=[True, True] + [False] * (len(operands) - 2)),
        cost_estimate=pl.CostEstimate(flops=flops,
                                      transcendentals=transcendentals,
                                      bytes_accessed=bytes_accessed),
    )(*operands)


def init_params(key, num_input, num_input_lstm, hidden_size):
    """Deterministic synthetic init matching the PyTorch shapes (+ init_lstm)."""
    k1, k2, k3, k4, k5, k6 = jax.random.split(key, 6)
    E, H = num_input_lstm, hidden_size
    K = num_input // 2

    s_enc = 1.0 / jnp.sqrt(jnp.float32(num_input))
    # input-major (num_input, E); rows interleaved [x0, y0, x1, y1, ...]
    wenc = jax.random.uniform(k1, (num_input, E), jnp.float32, -s_enc, s_enc)
    benc = jax.random.uniform(k2, (1, E), jnp.float32, -s_enc, s_enc)

    s = 1.0 / jnp.sqrt(jnp.float32(H))
    wih = jax.random.uniform(k3, (E, 4 * H), jnp.float32, -s, s)
    whh = jax.random.uniform(k4, (H, 4 * H), jnp.float32, -s, s)
    b_ih = jax.random.uniform(k5, (4 * H,), jnp.float32, -s, s)
    b_hh = jax.random.uniform(k6, (4 * H,), jnp.float32, -s, s)
    # init_lstm: forget-gate slice [H:2H] of every bias set to 1.0
    b_ih = b_ih.at[H:2 * H].set(1.0)
    b_hh = b_hh.at[H:2 * H].set(1.0)
    b = (b_ih + b_hh).reshape(1, 4 * H)

    # ----- kernel-side constants (built once at init, not per call) -----
    kidx = jnp.arange(K)
    # 0/1 selection matrix copying conf_k onto the x_k / y_k lanes.
    sel = jnp.zeros((3 * K, 3 * K), jnp.float32)
    sel = sel.at[3 * kidx + 2, 3 * kidx].set(1.0)
    sel = sel.at[3 * kidx + 2, 3 * kidx + 1].set(1.0)
    # Encoder weight laid out on the interleaved [x, y, conf] lanes (conf rows 0).
    wenc3 = jnp.zeros((3 * K, E), jnp.float32)
    wenc3 = wenc3.at[3 * kidx].set(wenc[2 * kidx])
    wenc3 = wenc3.at[3 * kidx + 1].set(wenc[2 * kidx + 1])
    # Pre-double the cell-gate (g) columns so tanh(g) = 2*sigmoid(2g) - 1.
    dbl = jnp.ones((1, 4 * H), jnp.float32).at[:, 2 * H:3 * H].set(2.0)

    return dict(
        # f32 reference weights
        wenc=wenc, benc=benc, wih=wih, whh=whh, b=b,
        # kernel-side constants
        sel=sel,
        wenc3=wenc3.astype(jnp.bfloat16),
        wih_k=(wih * dbl).astype(jnp.bfloat16),
        whh_k=(whh * dbl).astype(jnp.bfloat16),
        b_k=b * dbl,
    )


def ref_forward(features, lengths, params, thr):
    """Pure-JAX reference of the PyTorch forward (eval mode, 'sum' pooling)."""
    B, T, K, _ = features.shape
    H = params["whh"].shape[0]
    conf = features[..., 2]
    m = (conf > thr).astype(jnp.float32)
    pos = jnp.stack((features[..., 0] * m, features[..., 1] * m), axis=3)
    flat = pos.reshape(B, T, 2 * K)
    enc = jax.nn.relu(flat @ params["wenc"] + params["benc"])
    h = jnp.zeros((B, H), jnp.float32)
    c = jnp.zeros((B, H), jnp.float32)
    acc = jnp.zeros((B, H), jnp.float32)
    for t in range(T):
        gates = enc[:, t] @ params["wih"] + h @ params["whh"] + params["b"]
        i_g = jax.nn.sigmoid(gates[:, :H])
        f_g = jax.nn.sigmoid(gates[:, H:2 * H])
        g_g = jnp.tanh(gates[:, 2 * H:3 * H])
        o_g = jax.nn.sigmoid(gates[:, 3 * H:])
        c_new = f_g * c + i_g * g_g
        h_new = o_g * jnp.tanh(c_new)
        valid = (t < lengths)[:, None].astype(jnp.float32)
        h = valid * h_new + (1.0 - valid) * h
        c = valid * c_new + (1.0 - valid) * c
        acc = acc + valid * h_new
    return acc / lengths[:, None].astype(jnp.float32)


if __name__ == "__main__":
    B, T, K = 2, 8, 8
    num_input = 2 * K              # flattened (x, y) per keypoint
    num_input_lstm = 32
    hidden_size = 32
    conf_threshold = 0.5

    key = jax.random.PRNGKey(0)
    kf, kc, kparam = jax.random.split(key, 3)
    pos = jax.random.normal(kf, (B, T, K, 2), dtype=jnp.float32)
    conf = jax.random.uniform(kc, (B, T, K, 1), dtype=jnp.float32)
    features = jnp.concatenate([pos, conf], axis=-1)          # (B, T, K, 3)
    lengths = jnp.array([T, T - 3], dtype=jnp.int32)          # sorted descending

    params = init_params(kparam, num_input, num_input_lstm, hidden_size)

    fwd = jax.jit(functools.partial(lstm_skeleton_forward,
                                    conf_threshold=conf_threshold))
    out = jax.block_until_ready(fwd(features, lengths, params))

    ref = ref_forward(features, lengths, params, conf_threshold)
    assert out.shape == (B, hidden_size)
    assert jnp.allclose(out, ref, rtol=1e-2, atol=1e-2), (out, ref)
    print("KERNEL_OK")
</pallas_src>

<mosaic_0001>
module attributes {stable_mosaic.version = 11 : i64} {
  func.func @lstm_skeleton_kernel(%arg0: memref<64x24xf32, #tpu.memory_space<vmem>>, %arg1: memref<8x1xf32, #tpu.memory_space<vmem>>, %arg2: memref<24x24xf32, #tpu.memory_space<vmem>>, %arg3: memref<24x32xbf16, #tpu.memory_space<vmem>>, %arg4: memref<1x32xf32, #tpu.memory_space<vmem>>, %arg5: memref<32x128xbf16, #tpu.memory_space<vmem>>, %arg6: memref<32x128xbf16, #tpu.memory_space<vmem>>, %arg7: memref<1x128xf32, #tpu.memory_space<vmem>>, %arg8: memref<2x32xf32, #tpu.memory_space<vmem>>) attributes {dimension_semantics = [], scalar_prefetch = 0 : i64, scratch_operands = 0 : i64, tpu.core_type = #tpu.core_type<tc>} {
    %c0 = arith.constant 0 : index
    %c0_0 = arith.constant 0 : index
    %0 = vector.load %arg0[%c0, %c0_0] : memref<64x24xf32, #tpu.memory_space<vmem>>, vector<64x24xf32>
    %c0_1 = arith.constant 0 : index
    %c0_2 = arith.constant 0 : index
    %1 = vector.load %arg2[%c0_1, %c0_2] : memref<24x24xf32, #tpu.memory_space<vmem>>, vector<24x24xf32>
    %cst = arith.constant dense<0.000000e+00> : vector<64x24xf32>
    %2 = tpu.matmul %0, %1, %cst {dimension_numbers = #tpu.dot_dimension_numbers<[1], [0], [0], [1], [0, 0, 1, 1], [], []>} : vector<64x24xf32>, vector<24x24xf32>, vector<64x24xf32> -> vector<64x24xf32>
    %cst_3 = arith.constant 5.000000e-01 : f32
    %3 = vector.broadcast %cst_3 : f32 to vector<64x24xf32>
    %4 = arith.cmpf ogt, %2, %3 : vector<64x24xf32>
    %cst_4 = arith.constant 0.000000e+00 : f32
    %5 = vector.broadcast %cst_4 : f32 to vector<64x24xf32>
    %6 = arith.select %4, %0, %5 : vector<64x24xi1>, vector<64x24xf32>
    %7 = arith.truncf %6 : vector<64x24xf32> to vector<64x24xbf16>
    %c0_5 = arith.constant 0 : index
    %c0_6 = arith.constant 0 : index
    %8 = vector.load %arg3[%c0_5, %c0_6] : memref<24x32xbf16, #tpu.memory_space<vmem>>, vector<24x32xbf16>
    %cst_7 = arith.constant dense<0.000000e+00> : vector<64x32xf32>
    %9 = tpu.matmul %7, %8, %cst_7 {dimension_numbers = #tpu.dot_dimension_numbers<[1], [0], [0], [1], [0, 0, 1, 1], [], []>} : vector<64x24xbf16>, vector<24x32xbf16>, vector<64x32xf32> -> vector<64x32xf32>
    %c0_8 = arith.constant 0 : index
    %c0_9 = arith.constant 0 : index
    %10 = vector.load %arg4[%c0_8, %c0_9] : memref<1x32xf32, #tpu.memory_space<vmem>>, vector<1x32xf32>
    %11 = vector.broadcast %10 : vector<1x32xf32> to vector<64x32xf32>
    %12 = arith.addf %9, %11 : vector<64x32xf32>
    %cst_10 = arith.constant 0.000000e+00 : f32
    %13 = vector.broadcast %cst_10 : f32 to vector<64x32xf32>
    %14 = arith.maximumf %12, %13 : vector<64x32xf32>
    %15 = arith.truncf %14 : vector<64x32xf32> to vector<64x32xbf16>
    %c0_11 = arith.constant 0 : index
    %c0_12 = arith.constant 0 : index
    %16 = vector.load %arg5[%c0_11, %c0_12] : memref<32x128xbf16, #tpu.memory_space<vmem>>, vector<32x128xbf16>
    %cst_13 = arith.constant dense<0.000000e+00> : vector<64x128xf32>
    %17 = tpu.matmul %15, %16, %cst_13 {dimension_numbers = #tpu.dot_dimension_numbers<[1], [0], [0], [1], [0, 0, 1, 1], [], []>} : vector<64x32xbf16>, vector<32x128xbf16>, vector<64x128xf32> -> vector<64x128xf32>
    %c0_14 = arith.constant 0 : index
    %c0_15 = arith.constant 0 : index
    %18 = vector.load %arg7[%c0_14, %c0_15] : memref<1x128xf32, #tpu.memory_space<vmem>>, vector<1x128xf32>
    %19 = vector.broadcast %18 : vector<1x128xf32> to vector<64x128xf32>
    %20 = arith.addf %17, %19 : vector<64x128xf32>
    %c0_16 = arith.constant 0 : index
    %c0_17 = arith.constant 0 : index
    %21 = vector.load %arg6[%c0_16, %c0_17] : memref<32x128xbf16, #tpu.memory_space<vmem>>, vector<32x128xbf16>
    %c0_18 = arith.constant 0 : index
    %c0_19 = arith.constant 0 : index
    %22 = vector.load %arg1[%c0_18, %c0_19] : memref<8x1xf32, #tpu.memory_space<vmem>>, vector<8x1xf32>
    %cst_20 = arith.constant 0.000000e+00 : f32
    %23 = vector.broadcast %cst_20 : f32 to vector<8x32xf32>
    %cst_21 = arith.constant 0.000000e+00 : f32
    %24 = vector.broadcast %cst_21 : f32 to vector<8x32xf32>
    %cst_22 = arith.constant 0.000000e+00 : f32
    %25 = vector.broadcast %cst_22 : f32 to vector<8x32xf32>
    %26 = vector.extract_strided_slice %20 {offsets = [0, 0], sizes = [8, 128], strides = [1, 1]} : vector<64x128xf32> to vector<8x128xf32>
    %27 = arith.truncf %23 : vector<8x32xf32> to vector<8x32xbf16>
    %cst_23 = arith.constant dense<0.000000e+00> : vector<8x128xf32>
    %28 = tpu.matmul %27, %21, %cst_23 {dimension_numbers = #tpu.dot_dimension_numbers<[1], [0], [0], [1], [0, 0, 1, 1], [], []>} : vector<8x32xbf16>, vector<32x128xbf16>, vector<8x128xf32> -> vector<8x128xf32>
    %29 = arith.addf %26, %28 : vector<8x128xf32>
    %30 = arith.negf %29 : vector<8x128xf32>
    %31 = math.exp %30 : vector<8x128xf32>
    %cst_24 = arith.constant 1.000000e+00 : f32
    %32 = vector.broadcast %cst_24 : f32 to vector<8x128xf32>
    %33 = arith.addf %32, %31 : vector<8x128xf32>
    %34 = arith.divf %32, %33 : vector<8x128xf32>
    %35 = vector.extract_strided_slice %34 {offsets = [0, 0], sizes = [8, 32], strides = [1, 1]} : vector<8x128xf32> to vector<8x32xf32>
    %36 = vector.extract_strided_slice %34 {offsets = [0, 32], sizes = [8, 32], strides = [1, 1]} : vector<8x128xf32> to vector<8x32xf32>
    %37 = vector.extract_strided_slice %34 {offsets = [0, 64], sizes = [8, 32], strides = [1, 1]} : vector<8x128xf32> to vector<8x32xf32>
    %cst_25 = arith.constant 2.000000e+00 : f32
    %38 = vector.broadcast %cst_25 : f32 to vector<8x32xf32>
    %39 = arith.mulf %38, %37 : vector<8x32xf32>
    %cst_26 = arith.constant 1.000000e+00 : f32
    %40 = vector.broadcast %cst_26 : f32 to vector<8x32xf32>
    %41 = arith.subf %39, %40 : vector<8x32xf32>
    %42 = vector.extract_strided_slice %34 {offsets = [0, 96], sizes = [8, 32], strides = [1, 1]} : vector<8x128xf32> to vector<8x32xf32>
    %43 = arith.mulf %36, %24 : vector<8x32xf32>
    %44 = arith.mulf %35, %41 : vector<8x32xf32>
    %45 = arith.addf %43, %44 : vector<8x32xf32>
    %46 = math.tanh %45 : vector<8x32xf32>
    %47 = arith.mulf %42, %46 : vector<8x32xf32>
    %cst_27 = arith.constant 0.000000e+00 : f32
    %48 = vector.broadcast %cst_27 : f32 to vector<8x1xf32>
    %49 = arith.cmpf olt, %48, %22 : vector<8x1xf32>
    %50 = vector.shape_cast %49 : vector<8x1xi1> to vector<8x1xi1>
    %51 = vector.broadcast %50 : vector<8x1xi1> to vector<8x32xi1>
    %52 = arith.select %51, %47, %23 : vector<8x32xi1>, vector<8x32xf32>
    %53 = vector.shape_cast %49 : vector<8x1xi1> to vector<8x1xi1>
    %54 = vector.broadcast %53 : vector<8x1xi1> to vector<8x32xi1>
    %55 = arith.select %54, %45, %24 : vector<8x32xi1>, vector<8x32xf32>
    %cst_28 = arith.constant 0.000000e+00 : f32
    %56 = vector.shape_cast %49 : vector<8x1xi1> to vector<8x1xi1>
    %57 = vector.broadcast %56 : vector<8x1xi1> to vector<8x32xi1>
    %58 = vector.broadcast %cst_28 : f32 to vector<8x32xf32>
    %59 = arith.select %57, %47, %58 : vector<8x32xi1>, vector<8x32xf32>
    %60 = arith.addf %25, %59 : vector<8x32xf32>
    %61 = vector.extract_strided_slice %20 {offsets = [8, 0], sizes = [8, 128], strides = [1, 1]} : vector<64x128xf32> to vector<8x128xf32>
    %62 = arith.truncf %52 : vector<8x32xf32> to vector<8x32xbf16>
    %cst_29 = arith.constant dense<0.000000e+00> : vector<8x128xf32>
    %63 = tpu.matmul %62, %21, %cst_29 {dimension_numbers = #tpu.dot_dimension_numbers<[1], [0], [0], [1], [0, 0, 1, 1], [], []>} : vector<8x32xbf16>, vector<32x128xbf16>, vector<8x128xf32> -> vector<8x128xf32>
    %64 = arith.addf %61, %63 : vector<8x128xf32>
    %65 = arith.negf %64 : vector<8x128xf32>
    %66 = math.exp %65 : vector<8x128xf32>
    %cst_30 = arith.constant 1.000000e+00 : f32
    %67 = vector.broadcast %cst_30 : f32 to vector<8x128xf32>
    %68 = arith.addf %67, %66 : vector<8x128xf32>
    %69 = arith.divf %67, %68 : vector<8x128xf32>
    %70 = vector.extract_strided_slice %69 {offsets = [0, 0], sizes = [8, 32], strides = [1, 1]} : vector<8x128xf32> to vector<8x32xf32>
    %71 = vector.extract_strided_slice %69 {offsets = [0, 32], sizes = [8, 32], strides = [1, 1]} : vector<8x128xf32> to vector<8x32xf32>
    %72 = vector.extract_strided_slice %69 {offsets = [0, 64], sizes = [8, 32], strides = [1, 1]} : vector<8x128xf32> to vector<8x32xf32>
    %cst_31 = arith.constant 2.000000e+00 : f32
    %73 = vector.broadcast %cst_31 : f32 to vector<8x32xf32>
    %74 = arith.mulf %73, %72 : vector<8x32xf32>
    %cst_32 = arith.constant 1.000000e+00 : f32
    %75 = vector.broadcast %cst_32 : f32 to vector<8x32xf32>
    %76 = arith.subf %74, %75 : vector<8x32xf32>
    %77 = vector.extract_strided_slice %69 {offsets = [0, 96], sizes = [8, 32], strides = [1, 1]} : vector<8x128xf32> to vector<8x32xf32>
    %78 = arith.mulf %71, %55 : vector<8x32xf32>
    %79 = arith.mulf %70, %76 : vector<8x32xf32>
    %80 = arith.addf %78, %79 : vector<8x32xf32>
    %81 = math.tanh %80 : vector<8x32xf32>
    %82 = arith.mulf %77, %81 : vector<8x32xf32>
    %cst_33 = arith.constant 1.000000e+00 : f32
    %83 = vector.broadcast %cst_33 : f32 to vector<8x1xf32>
    %84 = arith.cmpf olt, %83, %22 : vector<8x1xf32>
    %85 = vector.shape_cast %84 : vector<8x1xi1> to vector<8x1xi1>
    %86 = vector.broadcast %85 : vector<8x1xi1> to vector<8x32xi1>
    %87 = arith.select %86, %82, %52 : vector<8x32xi1>, vector<8x32xf32>
    %88 = vector.shape_cast %84 : vector<8x1xi1> to vector<8x1xi1>
    %89 = vector.broadcast %88 : vector<8x1xi1> to vector<8x32xi1>
    %90 = arith.select %89, %80, %55 : vector<8x32xi1>, vector<8x32xf32>
    %cst_34 = arith.constant 0.000000e+00 : f32
    %91 = vector.shape_cast %84 : vector<8x1xi1> to vector<8x1xi1>
    %92 = vector.broadcast %91 : vector<8x1xi1> to vector<8x32xi1>
    %93 = vector.broadcast %cst_34 : f32 to vector<8x32xf32>
    %94 = arith.select %92, %82, %93 : vector<8x32xi1>, vector<8x32xf32>
    %95 = arith.addf %60, %94 : vector<8x32xf32>
    %96 = vector.extract_strided_slice %20 {offsets = [16, 0], sizes = [8, 128], strides = [1, 1]} : vector<64x128xf32> to vector<8x128xf32>
    %97 = arith.truncf %87 : vector<8x32xf32> to vector<8x32xbf16>
    %cst_35 = arith.constant dense<0.000000e+00> : vector<8x128xf32>
    %98 = tpu.matmul %97, %21, %cst_35 {dimension_numbers = #tpu.dot_dimension_numbers<[1], [0], [0], [1], [0, 0, 1, 1], [], []>} : vector<8x32xbf16>, vector<32x128xbf16>, vector<8x128xf32> -> vector<8x128xf32>
    %99 = arith.addf %96, %98 : vector<8x128xf32>
    %100 = arith.negf %99 : vector<8x128xf32>
    %101 = math.exp %100 : vector<8x128xf32>
    %cst_36 = arith.constant 1.000000e+00 : f32
    %102 = vector.broadcast %cst_36 : f32 to vector<8x128xf32>
    %103 = arith.addf %102, %101 : vector<8x128xf32>
    %104 = arith.divf %102, %103 : vector<8x128xf32>
    %105 = vector.extract_strided_slice %104 {offsets = [0, 0], sizes = [8, 32], strides = [1, 1]} : vector<8x128xf32> to vector<8x32xf32>
    %106 = vector.extract_strided_slice %104 {offsets = [0, 32], sizes = [8, 32], strides = [1, 1]} : vector<8x128xf32> to vector<8x32xf32>
    %107 = vector.extract_strided_slice %104 {offsets = [0, 64], sizes = [8, 32], strides = [1, 1]} : vector<8x128xf32> to vector<8x32xf32>
    %cst_37 = arith.constant 2.000000e+00 : f32
    %108 = vector.broadcast %cst_37 : f32 to vector<8x32xf32>
    %109 = arith.mulf %108, %107 : vector<8x32xf32>
    %cst_38 = arith.constant 1.000000e+00 : f32
    %110 = vector.broadcast %cst_38 : f32 to vector<8x32xf32>
    %111 = arith.subf %109, %110 : vector<8x32xf32>
    %112 = vector.extract_strided_slice %104 {offsets = [0, 96], sizes = [8, 32], strides = [1, 1]} : vector<8x128xf32> to vector<8x32xf32>
    %113 = arith.mulf %106, %90 : vector<8x32xf32>
    %114 = arith.mulf %105, %111 : vector<8x32xf32>
    %115 = arith.addf %113, %114 : vector<8x32xf32>
    %116 = math.tanh %115 : vector<8x32xf32>
    %117 = arith.mulf %112, %116 : vector<8x32xf32>
    %cst_39 = arith.constant 2.000000e+00 : f32
    %118 = vector.broadcast %cst_39 : f32 to vector<8x1xf32>
    %119 = arith.cmpf olt, %118, %22 : vector<8x1xf32>
    %120 = vector.shape_cast %119 : vector<8x1xi1> to vector<8x1xi1>
    %121 = vector.broadcast %120 : vector<8x1xi1> to vector<8x32xi1>
    %122 = arith.select %121, %117, %87 : vector<8x32xi1>, vector<8x32xf32>
    %123 = vector.shape_cast %119 : vector<8x1xi1> to vector<8x1xi1>
    %124 = vector.broadcast %123 : vector<8x1xi1> to vector<8x32xi1>
    %125 = arith.select %124, %115, %90 : vector<8x32xi1>, vector<8x32xf32>
    %cst_40 = arith.constant 0.000000e+00 : f32
    %126 = vector.shape_cast %119 : vector<8x1xi1> to vector<8x1xi1>
    %127 = vector.broadcast %126 : vector<8x1xi1> to vector<8x32xi1>
    %128 = vector.broadcast %cst_40 : f32 to vector<8x32xf32>
    %129 = arith.select %127, %117, %128 : vector<8x32xi1>, vector<8x32xf32>
    %130 = arith.addf %95, %129 : vector<8x32xf32>
    %131 = vector.extract_strided_slice %20 {offsets = [24, 0], sizes = [8, 128], strides = [1, 1]} : vector<64x128xf32> to vector<8x128xf32>
    %132 = arith.truncf %122 : vector<8x32xf32> to vector<8x32xbf16>
    %cst_41 = arith.constant dense<0.000000e+00> : vector<8x128xf32>
    %133 = tpu.matmul %132, %21, %cst_41 {dimension_numbers = #tpu.dot_dimension_numbers<[1], [0], [0], [1], [0, 0, 1, 1], [], []>} : vector<8x32xbf16>, vector<32x128xbf16>, vector<8x128xf32> -> vector<8x128xf32>
    %134 = arith.addf %131, %133 : vector<8x128xf32>
    %135 = arith.negf %134 : vector<8x128xf32>
    %136 = math.exp %135 : vector<8x128xf32>
    %cst_42 = arith.constant 1.000000e+00 : f32
    %137 = vector.broadcast %cst_42 : f32 to vector<8x128xf32>
    %138 = arith.addf %137, %136 : vector<8x128xf32>
    %139 = arith.divf %137, %138 : vector<8x128xf32>
    %140 = vector.extract_strided_slice %139 {offsets = [0, 0], sizes = [8, 32], strides = [1, 1]} : vector<8x128xf32> to vector<8x32xf32>
    %141 = vector.extract_strided_slice %139 {offsets = [0, 32], sizes = [8, 32], strides = [1, 1]} : vector<8x128xf32> to vector<8x32xf32>
    %142 = vector.extract_strided_slice %139 {offsets = [0, 64], sizes = [8, 32], strides = [1, 1]} : vector<8x128xf32> to vector<8x32xf32>
    %cst_43 = arith.constant 2.000000e+00 : f32
    %143 = vector.broadcast %cst_43 : f32 to vector<8x32xf32>
    %144 = arith.mulf %143, %142 : vector<8x32xf32>
    %cst_44 = arith.constant 1.000000e+00 : f32
    %145 = vector.broadcast %cst_44 : f32 to vector<8x32xf32>
    %146 = arith.subf %144, %145 : vector<8x32xf32>
    %147 = vector.extract_strided_slice %139 {offsets = [0, 96], sizes = [8, 32], strides = [1, 1]} : vector<8x128xf32> to vector<8x32xf32>
    %148 = arith.mulf %141, %125 : vector<8x32xf32>
    %149 = arith.mulf %140, %146 : vector<8x32xf32>
    %150 = arith.addf %148, %149 : vector<8x32xf32>
    %151 = math.tanh %150 : vector<8x32xf32>
    %152 = arith.mulf %147, %151 : vector<8x32xf32>
    %cst_45 = arith.constant 3.000000e+00 : f32
    %153 = vector.broadcast %cst_45 : f32 to vector<8x1xf32>
    %154 = arith.cmpf olt, %153, %22 : vector<8x1xf32>
    %155 = vector.shape_cast %154 : vector<8x1xi1> to vector<8x1xi1>
    %156 = vector.broadcast %155 : vector<8x1xi1> to vector<8x32xi1>
    %157 = arith.select %156, %152, %122 : vector<8x32xi1>, vector<8x32xf32>
    %158 = vector.shape_cast %154 : vector<8x1xi1> to vector<8x1xi1>
    %159 = vector.broadcast %158 : vector<8x1xi1> to vector<8x32xi1>
    %160 = arith.select %159, %150, %125 : vector<8x32xi1>, vector<8x32xf32>
    %cst_46 = arith.constant 0.000000e+00 : f32
    %161 = vector.shape_cast %154 : vector<8x1xi1> to vector<8x1xi1>
    %162 = vector.broadcast %161 : vector<8x1xi1> to vector<8x32xi1>
    %163 = vector.broadcast %cst_46 : f32 to vector<8x32xf32>
    %164 = arith.select %162, %152, %163 : vector<8x32xi1>, vector<8x32xf32>
    %165 = arith.addf %130, %164 : vector<8x32xf32>
    %166 = vector.extract_strided_slice %20 {offsets = [32, 0], sizes = [8, 128], strides = [1, 1]} : vector<64x128xf32> to vector<8x128xf32>
    %167 = arith.truncf %157 : vector<8x32xf32> to vector<8x32xbf16>
    %cst_47 = arith.constant dense<0.000000e+00> : vector<8x128xf32>
    %168 = tpu.matmul %167, %21, %cst_47 {dimension_numbers = #tpu.dot_dimension_numbers<[1], [0], [0], [1], [0, 0, 1, 1], [], []>} : vector<8x32xbf16>, vector<32x128xbf16>, vector<8x128xf32> -> vector<8x128xf32>
    %169 = arith.addf %166, %168 : vector<8x128xf32>
    %170 = arith.negf %169 : vector<8x128xf32>
    %171 = math.exp %170 : vector<8x128xf32>
    %cst_48 = arith.constant 1.000000e+00 : f32
    %172 = vector.broadcast %cst_48 : f32 to vector<8x128xf32>
    %173 = arith.addf %172, %171 : vector<8x128xf32>
    %174 = arith.divf %172, %173 : vector<8x128xf32>
    %175 = vector.extract_strided_slice %174 {offsets = [0, 0], sizes = [8, 32], strides = [1, 1]} : vector<8x128xf32> to vector<8x32xf32>
    %176 = vector.extract_strided_slice %174 {offsets = [0, 32], sizes = [8, 32], strides = [1, 1]} : vector<8x128xf32> to vector<8x32xf32>
    %177 = vector.extract_strided_slice %174 {offsets = [0, 64], sizes = [8, 32], strides = [1, 1]} : vector<8x128xf32> to vector<8x32xf32>
    %cst_49 = arith.constant 2.000000e+00 : f32
    %178 = vector.broadcast %cst_49 : f32 to vector<8x32xf32>
    %179 = arith.mulf %178, %177 : vector<8x32xf32>
    %cst_50 = arith.constant 1.000000e+00 : f32
    %180 = vector.broadcast %cst_50 : f32 to vector<8x32xf32>
    %181 = arith.subf %179, %180 : vector<8x32xf32>
    %182 = vector.extract_strided_slice %174 {offsets = [0, 96], sizes = [8, 32], strides = [1, 1]} : vector<8x128xf32> to vector<8x32xf32>
    %183 = arith.mulf %176, %160 : vector<8x32xf32>
    %184 = arith.mulf %175, %181 : vector<8x32xf32>
    %185 = arith.addf %183, %184 : vector<8x32xf32>
    %186 = math.tanh %185 : vector<8x32xf32>
    %187 = arith.mulf %182, %186 : vector<8x32xf32>
    %cst_51 = arith.constant 4.000000e+00 : f32
    %188 = vector.broadcast %cst_51 : f32 to vector<8x1xf32>
    %189 = arith.cmpf olt, %188, %22 : vector<8x1xf32>
    %190 = vector.shape_cast %189 : vector<8x1xi1> to vector<8x1xi1>
    %191 = vector.broadcast %190 : vector<8x1xi1> to vector<8x32xi1>
    %192 = arith.select %191, %187, %157 : vector<8x32xi1>, vector<8x32xf32>
    %193 = vector.shape_cast %189 : vector<8x1xi1> to vector<8x1xi1>
    %194 = vector.broadcast %193 : vector<8x1xi1> to vector<8x32xi1>
    %195 = arith.select %194, %185, %160 : vector<8x32xi1>, vector<8x32xf32>
    %cst_52 = arith.constant 0.000000e+00 : f32
    %196 = vector.shape_cast %189 : vector<8x1xi1> to vector<8x1xi1>
    %197 = vector.broadcast %196 : vector<8x1xi1> to vector<8x32xi1>
    %198 = vector.broadcast %cst_52 : f32 to vector<8x32xf32>
    %199 = arith.select %197, %187, %198 : vector<8x32xi1>, vector<8x32xf32>
    %200 = arith.addf %165, %199 : vector<8x32xf32>
    %201 = vector.extract_strided_slice %20 {offsets = [40, 0], sizes = [8, 128], strides = [1, 1]} : vector<64x128xf32> to vector<8x128xf32>
    %202 = arith.truncf %192 : vector<8x32xf32> to vector<8x32xbf16>
    %cst_53 = arith.constant dense<0.000000e+00> : vector<8x128xf32>
    %203 = tpu.matmul %202, %21, %cst_53 {dimension_numbers = #tpu.dot_dimension_numbers<[1], [0], [0], [1], [0, 0, 1, 1], [], []>} : vector<8x32xbf16>, vector<32x128xbf16>, vector<8x128xf32> -> vector<8x128xf32>
    %204 = arith.addf %201, %203 : vector<8x128xf32>
    %205 = arith.negf %204 : vector<8x128xf32>
    %206 = math.exp %205 : vector<8x128xf32>
    %cst_54 = arith.constant 1.000000e+00 : f32
    %207 = vector.broadcast %cst_54 : f32 to vector<8x128xf32>
    %208 = arith.addf %207, %206 : vector<8x128xf32>
    %209 = arith.divf %207, %208 : vector<8x128xf32>
    %210 = vector.extract_strided_slice %209 {offsets = [0, 0], sizes = [8, 32], strides = [1, 1]} : vector<8x128xf32> to vector<8x32xf32>
    %211 = vector.extract_strided_slice %209 {offsets = [0, 32], sizes = [8, 32], strides = [1, 1]} : vector<8x128xf32> to vector<8x32xf32>
    %212 = vector.extract_strided_slice %209 {offsets = [0, 64], sizes = [8, 32], strides = [1, 1]} : vector<8x128xf32> to vector<8x32xf32>
    %cst_55 = arith.constant 2.000000e+00 : f32
    %213 = vector.broadcast %cst_55 : f32 to vector<8x32xf32>
    %214 = arith.mulf %213, %212 : vector<8x32xf32>
    %cst_56 = arith.constant 1.000000e+00 : f32
    %215 = vector.broadcast %cst_56 : f32 to vector<8x32xf32>
    %216 = arith.subf %214, %215 : vector<8x32xf32>
    %217 = vector.extract_strided_slice %209 {offsets = [0, 96], sizes = [8, 32], strides = [1, 1]} : vector<8x128xf32> to vector<8x32xf32>
    %218 = arith.mulf %211, %195 : vector<8x32xf32>
    %219 = arith.mulf %210, %216 : vector<8x32xf32>
    %220 = arith.addf %218, %219 : vector<8x32xf32>
    %221 = math.tanh %220 : vector<8x32xf32>
    %222 = arith.mulf %217, %221 : vector<8x32xf32>
    %cst_57 = arith.constant 5.000000e+00 : f32
    %223 = vector.broadcast %cst_57 : f32 to vector<8x1xf32>
    %224 = arith.cmpf olt, %223, %22 : vector<8x1xf32>
    %225 = vector.shape_cast %224 : vector<8x1xi1> to vector<8x1xi1>
    %226 = vector.broadcast %225 : vector<8x1xi1> to vector<8x32xi1>
    %227 = arith.select %226, %222, %192 : vector<8x32xi1>, vector<8x32xf32>
    %228 = vector.shape_cast %224 : vector<8x1xi1> to vector<8x1xi1>
    %229 = vector.broadcast %228 : vector<8x1xi1> to vector<8x32xi1>
    %230 = arith.select %229, %220, %195 : vector<8x32xi1>, vector<8x32xf32>
    %cst_58 = arith.constant 0.000000e+00 : f32
    %231 = vector.shape_cast %224 : vector<8x1xi1> to vector<8x1xi1>
    %232 = vector.broadcast %231 : vector<8x1xi1> to vector<8x32xi1>
    %233 = vector.broadcast %cst_58 : f32 to vector<8x32xf32>
    %234 = arith.select %232, %222, %233 : vector<8x32xi1>, vector<8x32xf32>
    %235 = arith.addf %200, %234 : vector<8x32xf32>
    %236 = vector.extract_strided_slice %20 {offsets = [48, 0], sizes = [8, 128], strides = [1, 1]} : vector<64x128xf32> to vector<8x128xf32>
    %237 = arith.truncf %227 : vector<8x32xf32> to vector<8x32xbf16>
    %cst_59 = arith.constant dense<0.000000e+00> : vector<8x128xf32>
    %238 = tpu.matmul %237, %21, %cst_59 {dimension_numbers = #tpu.dot_dimension_numbers<[1], [0], [0], [1], [0, 0, 1, 1], [], []>} : vector<8x32xbf16>, vector<32x128xbf16>, vector<8x128xf32> -> vector<8x128xf32>
    %239 = arith.addf %236, %238 : vector<8x128xf32>
    %240 = arith.negf %239 : vector<8x128xf32>
    %241 = math.exp %240 : vector<8x128xf32>
    %cst_60 = arith.constant 1.000000e+00 : f32
    %242 = vector.broadcast %cst_60 : f32 to vector<8x128xf32>
    %243 = arith.addf %242, %241 : vector<8x128xf32>
    %244 = arith.divf %242, %243 : vector<8x128xf32>
    %245 = vector.extract_strided_slice %244 {offsets = [0, 0], sizes = [8, 32], strides = [1, 1]} : vector<8x128xf32> to vector<8x32xf32>
    %246 = vector.extract_strided_slice %244 {offsets = [0, 32], sizes = [8, 32], strides = [1, 1]} : vector<8x128xf32> to vector<8x32xf32>
    %247 = vector.extract_strided_slice %244 {offsets = [0, 64], sizes = [8, 32], strides = [1, 1]} : vector<8x128xf32> to vector<8x32xf32>
    %cst_61 = arith.constant 2.000000e+00 : f32
    %248 = vector.broadcast %cst_61 : f32 to vector<8x32xf32>
    %249 = arith.mulf %248, %247 : vector<8x32xf32>
    %cst_62 = arith.constant 1.000000e+00 : f32
    %250 = vector.broadcast %cst_62 : f32 to vector<8x32xf32>
    %251 = arith.subf %249, %250 : vector<8x32xf32>
    %252 = vector.extract_strided_slice %244 {offsets = [0, 96], sizes = [8, 32], strides = [1, 1]} : vector<8x128xf32> to vector<8x32xf32>
    %253 = arith.mulf %246, %230 : vector<8x32xf32>
    %254 = arith.mulf %245, %251 : vector<8x32xf32>
    %255 = arith.addf %253, %254 : vector<8x32xf32>
    %256 = math.tanh %255 : vector<8x32xf32>
    %257 = arith.mulf %252, %256 : vector<8x32xf32>
    %cst_63 = arith.constant 6.000000e+00 : f32
    %258 = vector.broadcast %cst_63 : f32 to vector<8x1xf32>
    %259 = arith.cmpf olt, %258, %22 : vector<8x1xf32>
    %260 = vector.shape_cast %259 : vector<8x1xi1> to vector<8x1xi1>
    %261 = vector.broadcast %260 : vector<8x1xi1> to vector<8x32xi1>
    %262 = arith.select %261, %257, %227 : vector<8x32xi1>, vector<8x32xf32>
    %263 = vector.shape_cast %259 : vector<8x1xi1> to vector<8x1xi1>
    %264 = vector.broadcast %263 : vector<8x1xi1> to vector<8x32xi1>
    %265 = arith.select %264, %255, %230 : vector<8x32xi1>, vector<8x32xf32>
    %cst_64 = arith.constant 0.000000e+00 : f32
    %266 = vector.shape_cast %259 : vector<8x1xi1> to vector<8x1xi1>
    %267 = vector.broadcast %266 : vector<8x1xi1> to vector<8x32xi1>
    %268 = vector.broadcast %cst_64 : f32 to vector<8x32xf32>
    %269 = arith.select %267, %257, %268 : vector<8x32xi1>, vector<8x32xf32>
    %270 = arith.addf %235, %269 : vector<8x32xf32>
    %271 = vector.extract_strided_slice %20 {offsets = [56, 0], sizes = [8, 128], strides = [1, 1]} : vector<64x128xf32> to vector<8x128xf32>
    %272 = arith.truncf %262 : vector<8x32xf32> to vector<8x32xbf16>
    %cst_65 = arith.constant dense<0.000000e+00> : vector<8x128xf32>
    %273 = tpu.matmul %272, %21, %cst_65 {dimension_numbers = #tpu.dot_dimension_numbers<[1], [0], [0], [1], [0, 0, 1, 1], [], []>} : vector<8x32xbf16>, vector<32x128xbf16>, vector<8x128xf32> -> vector<8x128xf32>
    %274 = arith.addf %271, %273 : vector<8x128xf32>
    %275 = arith.negf %274 : vector<8x128xf32>
    %276 = math.exp %275 : vector<8x128xf32>
    %cst_66 = arith.constant 1.000000e+00 : f32
    %277 = vector.broadcast %cst_66 : f32 to vector<8x128xf32>
    %278 = arith.addf %277, %276 : vector<8x128xf32>
    %279 = arith.divf %277, %278 : vector<8x128xf32>
    %280 = vector.extract_strided_slice %279 {offsets = [0, 0], sizes = [8, 32], strides = [1, 1]} : vector<8x128xf32> to vector<8x32xf32>
    %281 = vector.extract_strided_slice %279 {offsets = [0, 32], sizes = [8, 32], strides = [1, 1]} : vector<8x128xf32> to vector<8x32xf32>
    %282 = vector.extract_strided_slice %279 {offsets = [0, 64], sizes = [8, 32], strides = [1, 1]} : vector<8x128xf32> to vector<8x32xf32>
    %cst_67 = arith.constant 2.000000e+00 : f32
    %283 = vector.broadcast %cst_67 : f32 to vector<8x32xf32>
    %284 = arith.mulf %283, %282 : vector<8x32xf32>
    %cst_68 = arith.constant 1.000000e+00 : f32
    %285 = vector.broadcast %cst_68 : f32 to vector<8x32xf32>
    %286 = arith.subf %284, %285 : vector<8x32xf32>
    %287 = vector.extract_strided_slice %279 {offsets = [0, 96], sizes = [8, 32], strides = [1, 1]} : vector<8x128xf32> to vector<8x32xf32>
    %288 = arith.mulf %281, %265 : vector<8x32xf32>
    %289 = arith.mulf %280, %286 : vector<8x32xf32>
    %290 = arith.addf %288, %289 : vector<8x32xf32>
    %291 = math.tanh %290 : vector<8x32xf32>
    %292 = arith.mulf %287, %291 : vector<8x32xf32>
    %cst_69 = arith.constant 7.000000e+00 : f32
    %293 = vector.broadcast %cst_69 : f32 to vector<8x1xf32>
    %294 = arith.cmpf olt, %293, %22 : vector<8x1xf32>
    %cst_70 = arith.constant 0.000000e+00 : f32
    %295 = vector.shape_cast %294 : vector<8x1xi1> to vector<8x1xi1>
    %296 = vector.broadcast %295 : vector<8x1xi1> to vector<8x32xi1>
    %297 = vector.broadcast %cst_70 : f32 to vector<8x32xf32>
    %298 = arith.select %296, %292, %297 : vector<8x32xi1>, vector<8x32xf32>
    %299 = arith.addf %270, %298 : vector<8x32xf32>
    %cst_71 = arith.constant 1.000000e+00 : f32
    %300 = vector.broadcast %cst_71 : f32 to vector<8x1xf32>
    %301 = arith.maximumf %22, %300 : vector<8x1xf32>
    %302 = tpu.reciprocal %301 {approx = true} : vector<8x1xf32> -> vector<8x1xf32>
    %303 = vector.broadcast %302 : vector<8x1xf32> to vector<8x32xf32>
    %304 = arith.mulf %299, %303 : vector<8x32xf32>
    %305 = vector.extract_strided_slice %304 {offsets = [0, 0], sizes = [2, 32], strides = [1, 1]} : vector<8x32xf32> to vector<2x32xf32>
    %c0_72 = arith.constant 0 : index
    %c0_73 = arith.constant 0 : index
    %306 = vector.load %arg8[%c0_72, %c0_73] : memref<2x32xf32, #tpu.memory_space<vmem>>, vector<2x32xf32>
    tpu.vector_store %arg8[%c0_72, %c0_73], %305 {strides = array<i32>} : memref<2x32xf32, #tpu.memory_space<vmem>>, vector<2x32xf32>,
    return
  }
}

</mosaic_0001>

<llo_original>
// kernel: lstm_skeleton_forward.1
$region0: #{lstm_skeleton_forward.1}
  #allocation0 [shape = 'u32[]', space=smem, size = 0x4, offset = 0x4, fixed_abs, tag = 'smem constant byte address 0x4 - core index']
  #allocation1 [shape = 'u32[144,128]{1,0:T(1,128)}', space=vmem, size = 0x12000, scoped, tag = 'internal scratch']
  %s0 = inlined_call_operand.vmem [shape: f32[64,24], index: 0, kind: input, shape index: {}]
  %s1 = inlined_call_operand.vmem [shape: f32[8,1], index: 1, kind: input, shape index: {}]
  %s2 = inlined_call_operand.vmem [shape: f32[24,24], index: 2, kind: input, shape index: {}]
  %s3 = inlined_call_operand.vmem [shape: bf16[24,32], index: 3, kind: input, shape index: {}]
  %s4 = inlined_call_operand.vmem [shape: f32[1,32], index: 4, kind: input, shape index: {}]
  %s5 = inlined_call_operand.vmem [shape: bf16[32,128], index: 5, kind: input, shape index: {}]
  %s6 = inlined_call_operand.vmem [shape: bf16[32,128], index: 6, kind: input, shape index: {}]
  %s7 = inlined_call_operand.vmem [shape: f32[1,128], index: 7, kind: input, shape index: {}]
  %s8 = inlined_call_operand.hbm [shape: f32[2,32], index: 8, kind: output, shape index: {}]
  %s9 = sld [smem:[#allocation0]]
  $region42: #{lstm_skeleton_forward.1} parent=0
    _
  %s11 = ssub.s32 1, %s9
  %s12 = scalar_select 0, %s11, %s9
  $region1: #{lstm_skeleton_forward.1} parent=0
    #allocation2 [shape = 'u8[1024]{0}', space=vmem, size = 0x400, scoped, tag = 'output window, operand 0, single buffered']
    #allocation3 [shape = 's32[1]{0}', space=sflag, size = 0x4, scoped, tag = 'scoped memory for lstm_skeleton_forward.1']
    %13 = vsyncpa [#allocation3], 0
    // Predicated region
    $region2: #{lstm_skeleton_forward.1} parent=1 // pred_check
      _
    $region3: #{lstm_skeleton_forward.1} parent=1 // pred_check_branch
      %15 = sbr.rel (0) target = $region5
    $region4: #{lstm_skeleton_forward.1} parent=1 // pred_region
      _
    $region5: #{lstm_skeleton_forward.1} parent=1 // pred_fallthru
      _
    // Predicated region
    $region6: #{lstm_skeleton_forward.1} parent=1 // pred_check
      _
    $region7: #{lstm_skeleton_forward.1} parent=1 // pred_check_branch
      %17 = sbr.rel (0) target = $region9
    $region8: #{lstm_skeleton_forward.1} parent=1 // pred_region
      _
    $region9: #{lstm_skeleton_forward.1} parent=1 // pred_fallthru
      _
    // Predicated region
    $region10: #{lstm_skeleton_forward.1} parent=1 // pred_check
      _
    $region11: #{lstm_skeleton_forward.1} parent=1 // pred_check_branch
      %19 = sbr.rel (0) target = $region13
    $region12: #{lstm_skeleton_forward.1} parent=1 // pred_region
      _
    $region13: #{lstm_skeleton_forward.1} parent=1 // pred_fallthru
      _
    // Predicated region
    $region14: #{lstm_skeleton_forward.1} parent=1 // pred_check
      _
    $region15: #{lstm_skeleton_forward.1} parent=1 // pred_check_branch
      %21 = sbr.rel (0) target = $region17
    $region16: #{lstm_skeleton_forward.1} parent=1 // pred_region
      _
    $region17: #{lstm_skeleton_forward.1} parent=1 // pred_fallthru
      _
    // Predicated region
    $region18: #{lstm_skeleton_forward.1} parent=1 // pred_check
      _
    $region19: #{lstm_skeleton_forward.1} parent=1 // pred_check_branch
      %23 = sbr.rel (0) target = $region21
    $region20: #{lstm_skeleton_forward.1} parent=1 // pred_region
      _
    $region21: #{lstm_skeleton_forward.1} parent=1 // pred_fallthru
      _
    // Predicated region
    $region22: #{lstm_skeleton_forward.1} parent=1 // pred_check
      _
    $region23: #{lstm_skeleton_forward.1} parent=1 // pred_check_branch
      %25 = sbr.rel (0) target = $region25
    $region24: #{lstm_skeleton_forward.1} parent=1 // pred_region
      _
    $region25: #{lstm_skeleton_forward.1} parent=1 // pred_fallthru
      _
    // Predicated region
    $region26: #{lstm_skeleton_forward.1} parent=1 // pred_check
      _
    $region27: #{lstm_skeleton_forward.1} parent=1 // pred_check_branch
      %27 = sbr.rel (0) target = $region29
    $region28: #{lstm_skeleton_forward.1} parent=1 // pred_region
      _
    $region29: #{lstm_skeleton_forward.1} parent=1 // pred_fallthru
      _
    // Predicated region
    $region30: #{lstm_skeleton_forward.1} parent=1 // pred_check
      _
    $region31: #{lstm_skeleton_forward.1} parent=1 // pred_check_branch
      %29 = sbr.rel (0) target = $region33
    $region32: #{lstm_skeleton_forward.1} parent=1 // pred_region
      _
    $region33: #{lstm_skeleton_forward.1} parent=1 // pred_fallthru
      _
    %v31 = vld [vmem:[%s0] sm:$0xff]
    %v32 = vld [vmem:[%s0 + $0x8] sm:$0xff]
    %v33 = vld [vmem:[%s0 + $0x10] sm:$0xff]
    %v34 = vld [vmem:[%s0 + $0x18] sm:$0xff]
    %v35 = vld [vmem:[%s0 + $0x20] sm:$0xff]
    %v36 = vld [vmem:[%s0 + $0x28] sm:$0xff]
    %v37 = vld [vmem:[%s0 + $0x30] sm:$0xff]
    %v38 = vld [vmem:[%s0 + $0x38] sm:$0xff]
    %v39 = vld [vmem:[%s2] sm:$0xff]
    %v40 = vld [vmem:[%s2 + $0x8] sm:$0xff]
    %v41 = vld [vmem:[%s2 + $0x10] sm:$0xff]
    %vm42 = vcmask 195584
    %v44 = vsel %vm42, %v31, 0
    %v47 = vsel %vm42, %v32, 0
    %v50 = vsel %vm42, %v33, 0
    %v53 = vsel %vm42, %v34, 0
    %v56 = vsel %vm42, %v35, 0
    %v59 = vsel %vm42, %v36, 0
    %v62 = vsel %vm42, %v37, 0
    %v65 = vsel %vm42, %v38, 0
    %67 = vmatprep.subr.mxu0 0.0
    %68 = vmatpush1.msra.mxu0 %v39
    %69 = vmatprep.subr.mxu0 0.0
    %70 = vmatpush1.msra.mxu0 %v40
    %71 = vmatprep.subr.mxu0 0.0
    %72 = vmatpush1.msra.mxu0 %v41
    %73 = vmatprep.subr.mxu0 0.0
    %74 = vmatpush1.msra.mxu0 0.0
    %75 = vmatprep.subr.mxu0 0.0
    %76 = vmatpush1.msra.mxu0 0.0
    %77 = vmatprep.subr.mxu0 0.0
    %78 = vmatpush1.msra.mxu0 0.0
    %79 = vmatprep.subr.mxu0 0.0
    %80 = vmatpush1.msra.mxu0 0.0
    %81 = vmatprep.subr.mxu0 0.0
    %82 = vmatpush1.msra.mxu0 0.0
    %83 = vmatprep.subr.mxu0 0.0
    %84 = vmatpush1.msra.mxu0 0.0
    %85 = vmatprep.subr.mxu0 0.0
    %86 = vmatpush1.msra.mxu0 0.0
    %87 = vmatprep.subr.mxu0 0.0
    %88 = vmatpush1.msra.mxu0 0.0
    %89 = vmatprep.subr.mxu0 0.0
    %90 = vmatpush1.msra.mxu0 0.0
    %91 = vmatprep.subr.mxu0 0.0
    %92 = vmatpush1.msra.mxu0 0.0
    %93 = vmatprep.subr.mxu0 0.0
    %94 = vmatpush1.msra.mxu0 0.0
    %95 = vmatprep.subr.mxu0 0.0
    %96 = vmatpush1.msra.mxu0 0.0
    %97 = vmatprep.subr.mxu0 0.0
    %98 = vmatpush1.msra.mxu0 0.0
    %99 = vmatprep.subr.mxu0 0.0
    %100 = vmatpush1.msra.mxu0 0.0
    %101 = vmatprep.subr.mxu0 0.0
    %102 = vmatpush1.msra.mxu0 0.0
    %103 = vmatprep.subr.mxu0 0.0
    %104 = vmatpush1.msra.mxu0 0.0
    %105 = vmatprep.subr.mxu0 0.0
    %106 = vmatpush1.msra.mxu0 0.0
    %107 = vmatprep.subr.mxu0 0.0
    %108 = vmatpush1.msra.mxu0 0.0
    %109 = vmatprep.subr.mxu0 0.0
    %110 = vmatpush1.msra.mxu0 0.0
    %111 = vmatprep.subr.mxu0 0.0
    %112 = vmatpush1.msra.mxu0 0.0
    %113 = vmatprep.subr.mxu0 0.0
    %114 = vmatpush1.msra.mxu0 0.0
    %115 = vmatprep.subr.mxu0 0.0
    %116 = vmatpush1.msra.mxu0 0.0
    %117 = vmatprep.subr.mxu0 0.0
    %118 = vmatpush1.msra.mxu0 0.0
    %119 = vmatprep.subr.mxu0 0.0
    %120 = vmatpush1.msra.mxu0 0.0
    %121 = vmatprep.subr.mxu0 0.0
    %122 = vmatpush1.msra.mxu0 0.0
    %123 = vmatprep.subr.mxu0 0.0
    %124 = vmatpush1.msra.mxu0 0.0
    %125 = vmatprep.subr.mxu0 0.0
    %126 = vmatpush1.msra.mxu0 0.0
    %127 = vmatprep.subr.mxu0 0.0
    %128 = vmatpush1.msra.mxu0 0.0
    %129 = vmatprep.subr.mxu0 0.0
    %130 = vmatpush1.msra.mxu0 0.0
    %131 = vmatprep.mubr.f32.mxu0 0.0
    %132 = vmatmul.mubr.f32.gmra.mrb[0].mxu0 %v44
    %v133 = vpop.f32.mrb[0].mxu0
    %v134 = vadd.f32 0.0, %v133
    %v135 = vpop.f32.mrb[0].mxu0
    %136 = vmatprep.mubr.f32.mxu0 0.0
    %137 = vmatmul.mubr.f32.gmra.mrb[0].mxu0 %v47
    %v138 = vpop.f32.mrb[0].mxu0
    %v139 = vadd.f32 0.0, %v138
    %v140 = vpop.f32.mrb[0].mxu0
    %141 = vmatprep.mubr.f32.mxu0 0.0
    %142 = vmatmul.mubr.f32.gmra.mrb[0].mxu0 %v50
    %v143 = vpop.f32.mrb[0].mxu0
    %v144 = vadd.f32 0.0, %v143
    %v145 = vpop.f32.mrb[0].mxu0
    %146 = vmatprep.mubr.f32.mxu0 0.0
    %147 = vmatmul.mubr.f32.gmra.mrb[0].mxu0 %v53
    %v148 = vpop.f32.mrb[0].mxu0
    %v149 = vadd.f32 0.0, %v148
    %v150 = vpop.f32.mrb[0].mxu0
    %151 = vmatprep.mubr.f32.mxu0 0.0
    %152 = vmatmul.mubr.f32.gmra.mrb[0].mxu0 %v56
    %v153 = vpop.f32.mrb[0].mxu0
    %v154 = vadd.f32 0.0, %v153
    %v155 = vpop.f32.mrb[0].mxu0
    %156 = vmatprep.mubr.f32.mxu0 0.0
    %157 = vmatmul.mubr.f32.gmra.mrb[0].mxu0 %v59
    %v158 = vpop.f32.mrb[0].mxu0
    %v159 = vadd.f32 0.0, %v158
    %v160 = vpop.f32.mrb[0].mxu0
    %161 = vmatprep.mubr.f32.mxu0 0.0
    %162 = vmatmul.mubr.f32.gmra.mrb[0].mxu0 %v62
    %v163 = vpop.f32.mrb[0].mxu0
    %v164 = vadd.f32 0.0, %v163
    %v165 = vpop.f32.mrb[0].mxu0
    %166 = vmatprep.mubr.f32.mxu0 0.0
    %167 = vmatmul.mubr.f32.gmra.mrb[0].mxu0 %v65
    %v168 = vpop.f32.mrb[0].mxu0
    %v169 = vadd.f32 0.0, %v168
    %v170 = vpop.f32.mrb[0].mxu0
    %171 = vdwg.mxu0
    %vm172 = vcmp.gt.f32.partialorder %v134, 0.5
    %vm173 = vcmp.gt.f32.partialorder %v139, 0.5
    %vm174 = vcmp.gt.f32.partialorder %v144, 0.5
    %vm175 = vcmp.gt.f32.partialorder %v149, 0.5
    %vm176 = vcmp.gt.f32.partialorder %v154, 0.5
    %vm177 = vcmp.gt.f32.partialorder %v159, 0.5
    %vm178 = vcmp.gt.f32.partialorder %v164, 0.5
    %vm179 = vcmp.gt.f32.partialorder %v169, 0.5
    %v180 = vsel %vm172, %v31, 0.0
    %v181 = vsel %vm173, %v32, 0.0
    %v182 = vsel %vm174, %v33, 0.0
    %v183 = vsel %vm175, %v34, 0.0
    %v184 = vsel %vm176, %v35, 0.0
    %v185 = vsel %vm177, %v36, 0.0
    %v186 = vsel %vm178, %v37, 0.0
    %v187 = vsel %vm179, %v38, 0.0
    %v188 = vpack.c.bf16 %v181, %v180
    %v189 = vpack.c.bf16 %v183, %v182
    %v190 = vpack.c.bf16 %v185, %v184
    %v191 = vpack.c.bf16 %v187, %v186
    %v192 = vld [vmem:[%s3] sm:$0xf]
    %v193 = vld [vmem:[%s3 + $0x4] sm:$0xf]
    %v194 = vld [vmem:[%s3 + $0x8] sm:$0xf]
    %v195 = vld [vmem:[%s4] sm:$0x1]
    %v197 = vlaneseq
    %v198 = vshrl.u32 %v197, 7
    %v199 = vsub.s32 0, %v198
    %v200 = vrot.slane %v195, %v199
    %v205 = vunpack.c.l.b16 %v192
    %v206 = vunpack.c.l.b16 %v193
    %v207 = vunpack.c.l.b16 %v194
    %v208 = vpack.c.b16 %v206, %v205
    %v209 = vpack.c.b16 %v207, %v207
    %v212 = vsel %vm42, %v188, 0
    %v215 = vsel %vm42, %v189, 0
    %v218 = vsel %vm42, %v190, 0
    %v221 = vsel %vm42, %v191, 0
    %vm223 = vcmask 1043456
    %v225 = vsel %vm223, %v209, 0
    %227 = vmatprep.subr.bf16.mxu0 0
    %228 = vmatpush1.bf16.msra.mxu0 %v208
    %229 = vmatprep.subr.bf16.mxu0 0
    %230 = vmatpush1.bf16.msra.mxu0 %v225
    %231 = vmatprep.subr.bf16.mxu0 0
    %232 = vmatpush1.bf16.msra.mxu0 0
    %233 = vmatprep.subr.bf16.mxu0 0
    %234 = vmatpush1.bf16.msra.mxu0 0
    %235 = vmatprep.subr.bf16.mxu0 0
    %236 = vmatpush1.bf16.msra.mxu0 0
    %237 = vmatprep.subr.bf16.mxu0 0
    %238 = vmatpush1.bf16.msra.mxu0 0
    %239 = vmatprep.subr.bf16.mxu0 0
    %240 = vmatpush1.bf16.msra.mxu0 0
    %241 = vmatprep.subr.bf16.mxu0 0
    %242 = vmatpush1.bf16.msra.mxu0 0
    %243 = vmatprep.subr.bf16.mxu0 0
    %244 = vmatpush1.bf16.msra.mxu0 0
    %245 = vmatprep.subr.bf16.mxu0 0
    %246 = vmatpush1.bf16.msra.mxu0 0
    %247 = vmatprep.subr.bf16.mxu0 0
    %248 = vmatpush1.bf16.msra.mxu0 0
    %249 = vmatprep.subr.bf16.mxu0 0
    %250 = vmatpush1.bf16.msra.mxu0 0
    %251 = vmatprep.subr.bf16.mxu0 0
    %252 = vmatpush1.bf16.msra.mxu0 0
    %253 = vmatprep.subr.bf16.mxu0 0
    %254 = vmatpush1.bf16.msra.mxu0 0
    %255 = vmatprep.subr.bf16.mxu0 0
    %256 = vmatpush1.bf16.msra.mxu0 0
    %257 = vmatprep.subr.bf16.mxu0 0
    %258 = vmatpush1.bf16.msra.mxu0 0
    %259 = vmatprep.mubr.bf16.mxu0 0
    %260 = vmatmul.mubr.bf16.gmra.mrb[0].mxu0 %v212
    %v261 = vpop.f32.mrb[0].mxu0
    %v262 = vadd.f32 %v200, %v261
    %v263 = vpop.f32.mrb[0].mxu0
    %v264 = vpop.f32.mrb[0].mxu0
    %v265 = vadd.f32 %v200, %v264
    %v266 = vpop.f32.mrb[0].mxu0
    %267 = vmatprep.mubr.bf16.mxu0 0
    %268 = vmatmul.mubr.bf16.gmra.mrb[0].mxu0 %v215
    %v269 = vpop.f32.mrb[0].mxu0
    %v270 = vadd.f32 %v200, %v269
    %v271 = vpop.f32.mrb[0].mxu0
    %v272 = vpop.f32.mrb[0].mxu0
    %v273 = vadd.f32 %v200, %v272
    %v274 = vpop.f32.mrb[0].mxu0
    %275 = vmatprep.mubr.bf16.mxu0 0
    %276 = vmatmul.mubr.bf16.gmra.mrb[0].mxu0 %v218
    %v277 = vpop.f32.mrb[0].mxu0
    %v278 = vadd.f32 %v200, %v277
    %v279 = vpop.f32.mrb[0].mxu0
    %v280 = vpop.f32.mrb[0].mxu0
    %v281 = vadd.f32 %v200, %v280
    %v282 = vpop.f32.mrb[0].mxu0
    %283 = vmatprep.mubr.bf16.mxu0 0
    %284 = vmatmul.mubr.bf16.gmra.mrb[0].mxu0 %v221
    %v285 = vpop.f32.mrb[0].mxu0
    %v286 = vadd.f32 %v200, %v285
    %v287 = vpop.f32.mrb[0].mxu0
    %v288 = vpop.f32.mrb[0].mxu0
    %v289 = vadd.f32 %v200, %v288
    %v290 = vpop.f32.mrb[0].mxu0
    %291 = vdwg.mxu0
    %v292 = vmax.f32 %v262, 0.0
    %v293 = vmax.f32 %v265, 0.0
    %v294 = vmax.f32 %v270, 0.0
    %v295 = vmax.f32 %v273, 0.0
    %v296 = vmax.f32 %v278, 0.0
    %v297 = vmax.f32 %v281, 0.0
    %v298 = vmax.f32 %v286, 0.0
    %v299 = vmax.f32 %v289, 0.0
    %v300 = vpack.c.bf16 %v293, %v292
    %v301 = vpack.c.bf16 %v295, %v294
    %v302 = vpack.c.bf16 %v297, %v296
    %v303 = vpack.c.bf16 %v299, %v298
    %v304 = vld [vmem:[%s5] sm:$0xf]
    %v305 = vld [vmem:[%s5 + $0x4] sm:$0xf]
    %v306 = vld [vmem:[%s5 + $0x8] sm:$0xf]
    %v307 = vld [vmem:[%s5 + $0xc] sm:$0xf]
    %v308 = vld [vmem:[%s7] sm:$0x1]
    %v310 = vlaneseq
    %v311 = vshrl.u32 %v310, 7
    %v312 = vsub.s32 0, %v311
    %v313 = vrot.slane %v308, %v312
    %v319 = vunpack.c.l.b16 %v304
    %v320 = vunpack.c.l.b16 %v305
    %v321 = vunpack.c.l.b16 %v306
    %v322 = vunpack.c.l.b16 %v307
    %v323 = vpack.c.b16 %v320, %v319
    %v324 = vpack.c.b16 %v322, %v321
    %vm327 = vcmask 261120
    %v329 = vsel %vm327, %v300, 0
    %v332 = vsel %vm327, %v301, 0
    %v335 = vsel %vm327, %v302, 0
    %v338 = vsel %vm327, %v303, 0
    %340 = vmatprep.subr.bf16.mxu0 0
    %341 = vmatpush1.bf16.msra.mxu0 %v323
    %342 = vmatprep.subr.bf16.mxu0 0
    %343 = vmatpush1.bf16.msra.mxu0 %v324
    %344 = vmatprep.subr.bf16.mxu0 0
    %345 = vmatpush1.bf16.msra.mxu0 0
    %346 = vmatprep.subr.bf16.mxu0 0
    %347 = vmatpush1.bf16.msra.mxu0 0
    %348 = vmatprep.subr.bf16.mxu0 0
    %349 = vmatpush1.bf16.msra.mxu0 0
    %350 = vmatprep.subr.bf16.mxu0 0
    %351 = vmatpush1.bf16.msra.mxu0 0
    %352 = vmatprep.subr.bf16.mxu0 0
    %353 = vmatpush1.bf16.msra.mxu0 0
    %354 = vmatprep.subr.bf16.mxu0 0
    %355 = vmatpush1.bf16.msra.mxu0 0
    %356 = vmatprep.subr.bf16.mxu0 0
    %357 = vmatpush1.bf16.msra.mxu0 0
    %358 = vmatprep.subr.bf16.mxu0 0
    %359 = vmatpush1.bf16.msra.mxu0 0
    %360 = vmatprep.subr.bf16.mxu0 0
    %361 = vmatpush1.bf16.msra.mxu0 0
    %362 = vmatprep.subr.bf16.mxu0 0
    %363 = vmatpush1.bf16.msra.mxu0 0
    %364 = vmatprep.subr.bf16.mxu0 0
    %365 = vmatpush1.bf16.msra.mxu0 0
    %366 = vmatprep.subr.bf16.mxu0 0
    %367 = vmatpush1.bf16.msra.mxu0 0
    %368 = vmatprep.subr.bf16.mxu0 0
    %369 = vmatpush1.bf16.msra.mxu0 0
    %370 = vmatprep.subr.bf16.mxu0 0
    %371 = vmatpush1.bf16.msra.mxu0 0
    %372 = vmatprep.mubr.bf16.mxu0 0
    %373 = vmatmul.mubr.bf16.gmra.mrb[0].mxu0 %v329
    %v374 = vpop.f32.mrb[0].mxu0
    %v375 = vadd.f32 %v313, %v374
    %v376 = vpop.f32.mrb[0].mxu0
    %v377 = vpop.f32.mrb[0].mxu0
    %v378 = vadd.f32 %v313, %v377
    %v379 = vpop.f32.mrb[0].mxu0
    %380 = vmatprep.mubr.bf16.mxu0 0
    %381 = vmatmul.mubr.bf16.gmra.mrb[0].mxu0 %v332
    %v382 = vpop.f32.mrb[0].mxu0
    %v383 = vadd.f32 %v313, %v382
    %v384 = vpop.f32.mrb[0].mxu0
    %v385 = vpop.f32.mrb[0].mxu0
    %v386 = vadd.f32 %v313, %v385
    %v387 = vpop.f32.mrb[0].mxu0
    %388 = vmatprep.mubr.bf16.mxu0 0
    %389 = vmatmul.mubr.bf16.gmra.mrb[0].mxu0 %v335
    %v390 = vpop.f32.mrb[0].mxu0
    %v391 = vadd.f32 %v313, %v390
    %v392 = vpop.f32.mrb[0].mxu0
    %v393 = vpop.f32.mrb[0].mxu0
    %v394 = vadd.f32 %v313, %v393
    %v395 = vpop.f32.mrb[0].mxu0
    %396 = vmatprep.mubr.bf16.mxu0 0
    %397 = vmatmul.mubr.bf16.gmra.mrb[0].mxu0 %v338
    %v398 = vpop.f32.mrb[0].mxu0
    %v399 = vadd.f32 %v313, %v398
    %v400 = vpop.f32.mrb[0].mxu0
    %v401 = vpop.f32.mrb[0].mxu0
    %v402 = vadd.f32 %v313, %v401
    %v403 = vpop.f32.mrb[0].mxu0
    %404 = vdwg.mxu0
    %v405 = vld [vmem:[%s6] sm:$0xf]
    %v406 = vld [vmem:[%s6 + $0x4] sm:$0xf]
    %v407 = vld [vmem:[%s6 + $0x8] sm:$0xf]
    %v408 = vld [vmem:[%s6 + $0xc] sm:$0xf]
    %v409 = vld [vmem:[%s1] sm:$0xff]
    %v414 = vunpack.c.l.b16 %v405
    %v415 = vunpack.c.l.b16 %v406
    %v416 = vunpack.c.l.b16 %v407
    %v417 = vunpack.c.l.b16 %v408
    %v418 = vpack.c.b16 %v415, %v414
    %v419 = vpack.c.b16 %v417, %v416
    %v423 = vsel %vm327, 0, 0
    %425 = vmatprep.subr.bf16.mxu0 0
    %426 = vmatpush1.bf16.msra.mxu0 %v418
    %427 = vmatprep.subr.bf16.mxu0 0
    %428 = vmatpush1.bf16.msra.mxu0 %v419
    %429 = vmatprep.subr.bf16.mxu0 0
    %430 = vmatpush1.bf16.msra.mxu0 0
    %431 = vmatprep.subr.bf16.mxu0 0
    %432 = vmatpush1.bf16.msra.mxu0 0
    %433 = vmatprep.subr.bf16.mxu0 0
    %434 = vmatpush1.bf16.msra.mxu0 0
    %435 = vmatprep.subr.bf16.mxu0 0
    %436 = vmatpush1.bf16.msra.mxu0 0
    %437 = vmatprep.subr.bf16.mxu0 0
    %438 = vmatpush1.bf16.msra.mxu0 0
    %439 = vmatprep.subr.bf16.mxu0 0
    %440 = vmatpush1.bf16.msra.mxu0 0
    %441 = vmatprep.subr.bf16.mxu0 0
    %442 = vmatpush1.bf16.msra.mxu0 0
    %443 = vmatprep.subr.bf16.mxu0 0
    %444 = vmatpush1.bf16.msra.mxu0 0
    %445 = vmatprep.subr.bf16.mxu0 0
    %446 = vmatpush1.bf16.msra.mxu0 0
    %447 = vmatprep.subr.bf16.mxu0 0
    %448 = vmatpush1.bf16.msra.mxu0 0
    %449 = vmatprep.subr.bf16.mxu0 0
    %450 = vmatpush1.bf16.msra.mxu0 0
    %451 = vmatprep.subr.bf16.mxu0 0
    %452 = vmatpush1.bf16.msra.mxu0 0
    %453 = vmatprep.subr.bf16.mxu0 0
    %454 = vmatpush1.bf16.msra.mxu0 0
    %455 = vmatprep.subr.bf16.mxu0 0
    %456 = vmatpush1.bf16.msra.mxu0 0
    %457 = vmatprep.mubr.bf16.mxu0 0
    %458 = vmatmul.mubr.bf16.gmra.mrb[0].mxu0 %v423
    %v459 = vpop.f32.mrb[0].mxu0
    %v460 = vadd.f32 0.0, %v459
    %v461 = vpop.f32.mrb[0].mxu0
    %v462 = vpop.f32.mrb[0].mxu0
    %v463 = vpop.f32.mrb[0].mxu0
    %464 = vdwg.mxu0
    %v465 = vadd.f32 %v375, %v460
    %v466 = vxor.u32 %v465, 2147483648
    %v467 = vmul.f32 %v466, 1.442695
    %v468 = vpow.pop %v467
    %v469 = vadd.f32 %v468, 1.0
    %v470 = vrcp.pop %v469
    %v471 = vmul.f32 1.0, %v470
    %v472 = vmul.f32 %v471, 2.0
    %v473 = vsub.f32 %v472, 1.0
    %v474 = vmul.f32 %v471, 0.0
    %476 = vrot.lane.b32.xlu0 %v473, 64
    %v477 = vpop.permute.xlu0 %476
    %v479 = vmul.f32 %v471, %v477
    %481 = vrot.lane.b32.xlu0 %v479, 32
    %v482 = vpop.permute.xlu0 %481
    %v484 = vadd.f32 %v474, %v482
    %v485 = vtanh.pop %v484
    %487 = vrot.lane.b32.xlu0 %v485, 64
    %v488 = vpop.permute.xlu0 %487
    %v490 = vmul.f32 %v471, %v488
    %vm491 = vcmp.lt.f32.partialorder 0.0, %v409
    %v492 = vsel %vm491, 1, 0
    %493 = vset.pattern.permute.xlu0 0
    %494 = vperm.xlu0 %493, %v492
    %v495 = vpop.permute.xlu0 %494
    %vm496 = vcmp.eq.s32.totalorder %v495, 1
    %v497 = vsel %vm496, %v490, 0.0
    %v498 = vsel %vm496, %v484, 0.0
    %v499 = vadd.f32 %v497, 0.0
    %v500 = vpack.c.bf16 %v497, %v497
    %502 = vrot.lane.b32.xlu0 %v500, 32
    %v503 = vpop.permute.xlu0 %502
    %v505 = vsel %vm327, %v503, 0
    %507 = vmatprep.subr.bf16.mxu0 0
    %508 = vmatpush1.bf16.msra.mxu0 %v418
    %509 = vmatprep.subr.bf16.mxu0 0
    %510 = vmatpush1.bf16.msra.mxu0 %v419
    %511 = vmatprep.subr.bf16.mxu0 0
    %512 = vmatpush1.bf16.msra.mxu0 0
    %513 = vmatprep.subr.bf16.mxu0 0
    %514 = vmatpush1.bf16.msra.mxu0 0
    %515 = vmatprep.subr.bf16.mxu0 0
    %516 = vmatpush1.bf16.msra.mxu0 0
    %517 = vmatprep.subr.bf16.mxu0 0
    %518 = vmatpush1.bf16.msra.mxu0 0
    %519 = vmatprep.subr.bf16.mxu0 0
    %520 = vmatpush1.bf16.msra.mxu0 0
    %521 = vmatprep.subr.bf16.mxu0 0
    %522 = vmatpush1.bf16.msra.mxu0 0
    %523 = vmatprep.subr.bf16.mxu0 0
    %524 = vmatpush1.bf16.msra.mxu0 0
    %525 = vmatprep.subr.bf16.mxu0 0
    %526 = vmatpush1.bf16.msra.mxu0 0
    %527 = vmatprep.subr.bf16.mxu0 0
    %528 = vmatpush1.bf16.msra.mxu0 0
    %529 = vmatprep.subr.bf16.mxu0 0
    %530 = vmatpush1.bf16.msra.mxu0 0
    %531 = vmatprep.subr.bf16.mxu0 0
    %532 = vmatpush1.bf16.msra.mxu0 0
    %533 = vmatprep.subr.bf16.mxu0 0
    %534 = vmatpush1.bf16.msra.mxu0 0
    %535 = vmatprep.subr.bf16.mxu0 0
    %536 = vmatpush1.bf16.msra.mxu0 0
    %537 = vmatprep.subr.bf16.mxu0 0
    %538 = vmatpush1.bf16.msra.mxu0 0
    %539 = vmatprep.mubr.bf16.mxu0 0
    %540 = vmatmul.mubr.bf16.gmra.mrb[0].mxu0 %v505
    %v541 = vpop.f32.mrb[0].mxu0
    %v542 = vadd.f32 0.0, %v541
    %v543 = vpop.f32.mrb[0].mxu0
    %v544 = vpop.f32.mrb[0].mxu0
    %v545 = vpop.f32.mrb[0].mxu0
    %546 = vdwg.mxu0
    %v547 = vadd.f32 %v378, %v542
    %v548 = vxor.u32 %v547, 2147483648
    %v549 = vmul.f32 %v548, 1.442695
    %v550 = vpow.pop %v549
    %v551 = vadd.f32 %v550, 1.0
    %v552 = vrcp.pop %v551
    %v553 = vmul.f32 1.0, %v552
    %v554 = vmul.f32 %v553, 2.0
    %v555 = vsub.f32 %v554, 1.0
    %v556 = vmul.f32 %v553, %v498
    %558 = vrot.lane.b32.xlu0 %v555, 64
    %v559 = vpop.permute.xlu0 %558
    %v561 = vmul.f32 %v553, %v559
    %563 = vrot.lane.b32.xlu0 %v561, 32
    %v564 = vpop.permute.xlu0 %563
    %v566 = vadd.f32 %v556, %v564
    %v567 = vtanh.pop %v566
    %569 = vrot.lane.b32.xlu0 %v567, 64
    %v570 = vpop.permute.xlu0 %569
    %v572 = vmul.f32 %v553, %v570
    %vm573 = vcmp.lt.f32.partialorder 1.0, %v409
    %v574 = vsel %vm573, 1, 0
    %575 = vset.pattern.permute.xlu0 0
    %576 = vperm.xlu0 %575, %v574
    %v577 = vpop.permute.xlu0 %576
    %vm578 = vcmp.eq.s32.totalorder %v577, 1
    %v579 = vsel %vm578, %v572, %v497
    %v580 = vsel %vm578, %v566, %v498
    %v581 = vsel %vm578, %v572, 0.0
    %v582 = vadd.f32 %v499, %v581
    %v583 = vpack.c.bf16 %v579, %v579
    %585 = vrot.lane.b32.xlu0 %v583, 32
    %v586 = vpop.permute.xlu0 %585
    %v588 = vsel %vm327, %v586, 0
    %590 = vmatprep.subr.bf16.mxu0 0
    %591 = vmatpush1.bf16.msra.mxu0 %v418
    %592 = vmatprep.subr.bf16.mxu0 0
    %593 = vmatpush1.bf16.msra.mxu0 %v419
    %594 = vmatprep.subr.bf16.mxu0 0
    %595 = vmatpush1.bf16.msra.mxu0 0
    %596 = vmatprep.subr.bf16.mxu0 0
    %597 = vmatpush1.bf16.msra.mxu0 0
    %598 = vmatprep.subr.bf16.mxu0 0
    %599 = vmatpush1.bf16.msra.mxu0 0
    %600 = vmatprep.subr.bf16.mxu0 0
    %601 = vmatpush1.bf16.msra.mxu0 0
    %602 = vmatprep.subr.bf16.mxu0 0
    %603 = vmatpush1.bf16.msra.mxu0 0
    %604 = vmatprep.subr.bf16.mxu0 0
    %605 = vmatpush1.bf16.msra.mxu0 0
    %606 = vmatprep.subr.bf16.mxu0 0
    %607 = vmatpush1.bf16.msra.mxu0 0
    %608 = vmatprep.subr.bf16.mxu0 0
    %609 = vmatpush1.bf16.msra.mxu0 0
    %610 = vmatprep.subr.bf16.mxu0 0
    %611 = vmatpush1.bf16.msra.mxu0 0
    %612 = vmatprep.subr.bf16.mxu0 0
    %613 = vmatpush1.bf16.msra.mxu0 0
    %614 = vmatprep.subr.bf16.mxu0 0
    %615 = vmatpush1.bf16.msra.mxu0 0
    %616 = vmatprep.subr.bf16.mxu0 0
    %617 = vmatpush1.bf16.msra.mxu0 0
    %618 = vmatprep.subr.bf16.mxu0 0
    %619 = vmatpush1.bf16.msra.mxu0 0
    %620 = vmatprep.subr.bf16.mxu0 0
    %621 = vmatpush1.bf16.msra.mxu0 0
    %622 = vmatprep.mubr.bf16.mxu0 0
    %623 = vmatmul.mubr.bf16.gmra.mrb[0].mxu0 %v588
    %v624 = vpop.f32.mrb[0].mxu0
    %v625 = vadd.f32 0.0, %v624
    %v626 = vpop.f32.mrb[0].mxu0
    %v627 = vpop.f32.mrb[0].mxu0
    %v628 = vpop.f32.mrb[0].mxu0
    %629 = vdwg.mxu0
    %v630 = vadd.f32 %v383, %v625
    %v631 = vxor.u32 %v630, 2147483648
    %v632 = vmul.f32 %v631, 1.442695
    %v633 = vpow.pop %v632
    %v634 = vadd.f32 %v633, 1.0
    %v635 = vrcp.pop %v634
    %v636 = vmul.f32 1.0, %v635
    %v637 = vmul.f32 %v636, 2.0
    %v638 = vsub.f32 %v637, 1.0
    %v639 = vmul.f32 %v636, %v580
    %641 = vrot.lane.b32.xlu0 %v638, 64
    %v642 = vpop.permute.xlu0 %641
    %v644 = vmul.f32 %v636, %v642
    %646 = vrot.lane.b32.xlu0 %v644, 32
    %v647 = vpop.permute.xlu0 %646
    %v649 = vadd.f32 %v639, %v647
    %v650 = vtanh.pop %v649
    %652 = vrot.lane.b32.xlu0 %v650, 64
    %v653 = vpop.permute.xlu0 %652
    %v655 = vmul.f32 %v636, %v653
    %vm656 = vcmp.lt.f32.partialorder 2.0, %v409
    %v657 = vsel %vm656, 1, 0
    %658 = vset.pattern.permute.xlu0 0
    %659 = vperm.xlu0 %658, %v657
    %v660 = vpop.permute.xlu0 %659
    %vm661 = vcmp.eq.s32.totalorder %v660, 1
    %v662 = vsel %vm661, %v655, %v579
    %v663 = vsel %vm661, %v649, %v580
    %v664 = vsel %vm661, %v655, 0.0
    %v665 = vadd.f32 %v582, %v664
    %v666 = vpack.c.bf16 %v662, %v662
    %668 = vrot.lane.b32.xlu0 %v666, 32
    %v669 = vpop.permute.xlu0 %668
    %v671 = vsel %vm327, %v669, 0
    %673 = vmatprep.subr.bf16.mxu0 0
    %674 = vmatpush1.bf16.msra.mxu0 %v418
    %675 = vmatprep.subr.bf16.mxu0 0
    %676 = vmatpush1.bf16.msra.mxu0 %v419
    %677 = vmatprep.subr.bf16.mxu0 0
    %678 = vmatpush1.bf16.msra.mxu0 0
    %679 = vmatprep.subr.bf16.mxu0 0
    %680 = vmatpush1.bf16.msra.mxu0 0
    %681 = vmatprep.subr.bf16.mxu0 0
    %682 = vmatpush1.bf16.msra.mxu0 0
    %683 = vmatprep.subr.bf16.mxu0 0
    %684 = vmatpush1.bf16.msra.mxu0 0
    %685 = vmatprep.subr.bf16.mxu0 0
    %686 = vmatpush1.bf16.msra.mxu0 0
    %687 = vmatprep.subr.bf16.mxu0 0
    %688 = vmatpush1.bf16.msra.mxu0 0
    %689 = vmatprep.subr.bf16.mxu0 0
    %690 = vmatpush1.bf16.msra.mxu0 0
    %691 = vmatprep.subr.bf16.mxu0 0
    %692 = vmatpush1.bf16.msra.mxu0 0
    %693 = vmatprep.subr.bf16.mxu0 0
    %694 = vmatpush1.bf16.msra.mxu0 0
    %695 = vmatprep.subr.bf16.mxu0 0
    %696 = vmatpush1.bf16.msra.mxu0 0
    %697 = vmatprep.subr.bf16.mxu0 0
    %698 = vmatpush1.bf16.msra.mxu0 0
    %699 = vmatprep.subr.bf16.mxu0 0
    %700 = vmatpush1.bf16.msra.mxu0 0
    %701 = vmatprep.subr.bf16.mxu0 0
    %702 = vmatpush1.bf16.msra.mxu0 0
    %703 = vmatprep.subr.bf16.mxu0 0
    %704 = vmatpush1.bf16.msra.mxu0 0
    %705 = vmatprep.mubr.bf16.mxu0 0
    %706 = vmatmul.mubr.bf16.gmra.mrb[0].mxu0 %v671
    %v707 = vpop.f32.mrb[0].mxu0
    %v708 = vadd.f32 0.0, %v707
    %v709 = vpop.f32.mrb[0].mxu0
    %v710 = vpop.f32.mrb[0].mxu0
    %v711 = vpop.f32.mrb[0].mxu0
    %712 = vdwg.mxu0
    %v713 = vadd.f32 %v386, %v708
    %v714 = vxor.u32 %v713, 2147483648
    %v715 = vmul.f32 %v714, 1.442695
    %v716 = vpow.pop %v715
    %v717 = vadd.f32 %v716, 1.0
    %v718 = vrcp.pop %v717
    %v719 = vmul.f32 1.0, %v718
    %v720 = vmul.f32 %v719, 2.0
    %v721 = vsub.f32 %v720, 1.0
    %v722 = vmul.f32 %v719, %v663
    %724 = vrot.lane.b32.xlu0 %v721, 64
    %v725 = vpop.permute.xlu0 %724
    %v727 = vmul.f32 %v719, %v725
    %729 = vrot.lane.b32.xlu0 %v727, 32
    %v730 = vpop.permute.xlu0 %729
    %v732 = vadd.f32 %v722, %v730
    %v733 = vtanh.pop %v732
    %735 = vrot.lane.b32.xlu0 %v733, 64
    %v736 = vpop.permute.xlu0 %735
    %v738 = vmul.f32 %v719, %v736
    %vm739 = vcmp.lt.f32.partialorder 3.0, %v409
    %v740 = vsel %vm739, 1, 0
    %741 = vset.pattern.permute.xlu0 0
    %742 = vperm.xlu0 %741, %v740
    %v743 = vpop.permute.xlu0 %742
    %vm744 = vcmp.eq.s32.totalorder %v743, 1
    %v745 = vsel %vm744, %v738, %v662
    %v746 = vsel %vm744, %v732, %v663
    %v747 = vsel %vm744, %v738, 0.0
    %v748 = vadd.f32 %v665, %v747
    %v749 = vpack.c.bf16 %v745, %v745
    %751 = vrot.lane.b32.xlu0 %v749, 32
    %v752 = vpop.permute.xlu0 %751
    %v754 = vsel %vm327, %v752, 0
    %756 = vmatprep.subr.bf16.mxu0 0
    %757 = vmatpush1.bf16.msra.mxu0 %v418
    %758 = vmatprep.subr.bf16.mxu0 0
    %759 = vmatpush1.bf16.msra.mxu0 %v419
    %760 = vmatprep.subr.bf16.mxu0 0
    %761 = vmatpush1.bf16.msra.mxu0 0
    %762 = vmatprep.subr.bf16.mxu0 0
    %763 = vmatpush1.bf16.msra.mxu0 0
    %764 = vmatprep.subr.bf16.mxu0 0
    %765 = vmatpush1.bf16.msra.mxu0 0
    %766 = vmatprep.subr.bf16.mxu0 0
    %767 = vmatpush1.bf16.msra.mxu0 0
    %768 = vmatprep.subr.bf16.mxu0 0
    %769 = vmatpush1.bf16.msra.mxu0 0
    %770 = vmatprep.subr.bf16.mxu0 0
    %771 = vmatpush1.bf16.msra.mxu0 0
    %772 = vmatprep.subr.bf16.mxu0 0
    %773 = vmatpush1.bf16.msra.mxu0 0
    %774 = vmatprep.subr.bf16.mxu0 0
    %775 = vmatpush1.bf16.msra.mxu0 0
    %776 = vmatprep.subr.bf16.mxu0 0
    %777 = vmatpush1.bf16.msra.mxu0 0
    %778 = vmatprep.subr.bf16.mxu0 0
    %779 = vmatpush1.bf16.msra.mxu0 0
    %780 = vmatprep.subr.bf16.mxu0 0
    %781 = vmatpush1.bf16.msra.mxu0 0
    %782 = vmatprep.subr.bf16.mxu0 0
    %783 = vmatpush1.bf16.msra.mxu0 0
    %784 = vmatprep.subr.bf16.mxu0 0
    %785 = vmatpush1.bf16.msra.mxu0 0
    %786 = vmatprep.subr.bf16.mxu0 0
    %787 = vmatpush1.bf16.msra.mxu0 0
    %788 = vmatprep.mubr.bf16.mxu0 0
    %789 = vmatmul.mubr.bf16.gmra.mrb[0].mxu0 %v754
    %v790 = vpop.f32.mrb[0].mxu0
    %v791 = vadd.f32 0.0, %v790
    %v792 = vpop.f32.mrb[0].mxu0
    %v793 = vpop.f32.mrb[0].mxu0
    %v794 = vpop.f32.mrb[0].mxu0
    %795 = vdwg.mxu0
    %v796 = vadd.f32 %v391, %v791
    %v797 = vxor.u32 %v796, 2147483648
    %v798 = vmul.f32 %v797, 1.442695
    %v799 = vpow.pop %v798
    %v800 = vadd.f32 %v799, 1.0
    %v801 = vrcp.pop %v800
    %v802 = vmul.f32 1.0, %v801
    %v803 = vmul.f32 %v802, 2.0
    %v804 = vsub.f32 %v803, 1.0
    %v805 = vmul.f32 %v802, %v746
    %807 = vrot.lane.b32.xlu0 %v804, 64
    %v808 = vpop.permute.xlu0 %807
    %v810 = vmul.f32 %v802, %v808
    %812 = vrot.lane.b32.xlu0 %v810, 32
    %v813 = vpop.permute.xlu0 %812
    %v815 = vadd.f32 %v805, %v813
    %v816 = vtanh.pop %v815
    %818 = vrot.lane.b32.xlu0 %v816, 64
    %v819 = vpop.permute.xlu0 %818
    %v821 = vmul.f32 %v802, %v819
    %vm822 = vcmp.lt.f32.partialorder 4.0, %v409
    %v823 = vsel %vm822, 1, 0
    %824 = vset.pattern.permute.xlu0 0
    %825 = vperm.xlu0 %824, %v823
    %v826 = vpop.permute.xlu0 %825
    %vm827 = vcmp.eq.s32.totalorder %v826, 1
    %v828 = vsel %vm827, %v821, %v745
    %v829 = vsel %vm827, %v815, %v746
    %v830 = vsel %vm827, %v821, 0.0
    %v831 = vadd.f32 %v748, %v830
    %v832 = vpack.c.bf16 %v828, %v828
    %834 = vrot.lane.b32.xlu0 %v832, 32
    %v835 = vpop.permute.xlu0 %834
    %v837 = vsel %vm327, %v835, 0
    %839 = vmatprep.subr.bf16.mxu0 0
    %840 = vmatpush1.bf16.msra.mxu0 %v418
    %841 = vmatprep.subr.bf16.mxu0 0
    %842 = vmatpush1.bf16.msra.mxu0 %v419
    %843 = vmatprep.subr.bf16.mxu0 0
    %844 = vmatpush1.bf16.msra.mxu0 0
    %845 = vmatprep.subr.bf16.mxu0 0
    %846 = vmatpush1.bf16.msra.mxu0 0
    %847 = vmatprep.subr.bf16.mxu0 0
    %848 = vmatpush1.bf16.msra.mxu0 0
    %849 = vmatprep.subr.bf16.mxu0 0
    %850 = vmatpush1.bf16.msra.mxu0 0
    %851 = vmatprep.subr.bf16.mxu0 0
    %852 = vmatpush1.bf16.msra.mxu0 0
    %853 = vmatprep.subr.bf16.mxu0 0
    %854 = vmatpush1.bf16.msra.mxu0 0
    %855 = vmatprep.subr.bf16.mxu0 0
    %856 = vmatpush1.bf16.msra.mxu0 0
    %857 = vmatprep.subr.bf16.mxu0 0
    %858 = vmatpush1.bf16.msra.mxu0 0
    %859 = vmatprep.subr.bf16.mxu0 0
    %860 = vmatpush1.bf16.msra.mxu0 0
    %861 = vmatprep.subr.bf16.mxu0 0
    %862 = vmatpush1.bf16.msra.mxu0 0
    %863 = vmatprep.subr.bf16.mxu0 0
    %864 = vmatpush1.bf16.msra.mxu0 0
    %865 = vmatprep.subr.bf16.mxu0 0
    %866 = vmatpush1.bf16.msra.mxu0 0
    %867 = vmatprep.subr.bf16.mxu0 0
    %868 = vmatpush1.bf16.msra.mxu0 0
    %869 = vmatprep.subr.bf16.mxu0 0
    %870 = vmatpush1.bf16.msra.mxu0 0
    %871 = vmatprep.mubr.bf16.mxu0 0
    %872 = vmatmul.mubr.bf16.gmra.mrb[0].mxu0 %v837
    %v873 = vpop.f32.mrb[0].mxu0
    %v874 = vadd.f32 0.0, %v873
    %v875 = vpop.f32.mrb[0].mxu0
    %v876 = vpop.f32.mrb[0].mxu0
    %v877 = vpop.f32.mrb[0].mxu0
    %878 = vdwg.mxu0
    %v879 = vadd.f32 %v394, %v874
    %v880 = vxor.u32 %v879, 2147483648
    %v881 = vmul.f32 %v880, 1.442695
    %v882 = vpow.pop %v881
    %v883 = vadd.f32 %v882, 1.0
    %v884 = vrcp.pop %v883
    %v885 = vmul.f32 1.0, %v884
    %v886 = vmul.f32 %v885, 2.0
    %v887 = vsub.f32 %v886, 1.0
    %v888 = vmul.f32 %v885, %v829
    %890 = vrot.lane.b32.xlu0 %v887, 64
    %v891 = vpop.permute.xlu0 %890
    %v893 = vmul.f32 %v885, %v891
    %895 = vrot.lane.b32.xlu0 %v893, 32
    %v896 = vpop.permute.xlu0 %895
    %v898 = vadd.f32 %v888, %v896
    %v899 = vtanh.pop %v898
    %901 = vrot.lane.b32.xlu0 %v899, 64
    %v902 = vpop.permute.xlu0 %901
    %v904 = vmul.f32 %v885, %v902
    %vm905 = vcmp.lt.f32.partialorder 5.0, %v409
    %v906 = vsel %vm905, 1, 0
    %907 = vset.pattern.permute.xlu0 0
    %908 = vperm.xlu0 %907, %v906
    %v909 = vpop.permute.xlu0 %908
    %vm910 = vcmp.eq.s32.totalorder %v909, 1
    %v911 = vsel %vm910, %v904, %v828
    %v912 = vsel %vm910, %v898, %v829
    %v913 = vsel %vm910, %v904, 0.0
    %v914 = vadd.f32 %v831, %v913
    %v915 = vpack.c.bf16 %v911, %v911
    %917 = vrot.lane.b32.xlu0 %v915, 32
    %v918 = vpop.permute.xlu0 %917
    %v920 = vsel %vm327, %v918, 0
    %922 = vmatprep.subr.bf16.mxu0 0
    %923 = vmatpush1.bf16.msra.mxu0 %v418
    %924 = vmatprep.subr.bf16.mxu0 0
    %925 = vmatpush1.bf16.msra.mxu0 %v419
    %926 = vmatprep.subr.bf16.mxu0 0
    %927 = vmatpush1.bf16.msra.mxu0 0
    %928 = vmatprep.subr.bf16.mxu0 0
    %929 = vmatpush1.bf16.msra.mxu0 0
    %930 = vmatprep.subr.bf16.mxu0 0
    %931 = vmatpush1.bf16.msra.mxu0 0
    %932 = vmatprep.subr.bf16.mxu0 0
    %933 = vmatpush1.bf16.msra.mxu0 0
    %934 = vmatprep.subr.bf16.mxu0 0
    %935 = vmatpush1.bf16.msra.mxu0 0
    %936 = vmatprep.subr.bf16.mxu0 0
    %937 = vmatpush1.bf16.msra.mxu0 0
    %938 = vmatprep.subr.bf16.mxu0 0
    %939 = vmatpush1.bf16.msra.mxu0 0
    %940 = vmatprep.subr.bf16.mxu0 0
    %941 = vmatpush1.bf16.msra.mxu0 0
    %942 = vmatprep.subr.bf16.mxu0 0
    %943 = vmatpush1.bf16.msra.mxu0 0
    %944 = vmatprep.subr.bf16.mxu0 0
    %945 = vmatpush1.bf16.msra.mxu0 0
    %946 = vmatprep.subr.bf16.mxu0 0
    %947 = vmatpush1.bf16.msra.mxu0 0
    %948 = vmatprep.subr.bf16.mxu0 0
    %949 = vmatpush1.bf16.msra.mxu0 0
    %950 = vmatprep.subr.bf16.mxu0 0
    %951 = vmatpush1.bf16.msra.mxu0 0
    %952 = vmatprep.subr.bf16.mxu0 0
    %953 = vmatpush1.bf16.msra.mxu0 0
    %954 = vmatprep.mubr.bf16.mxu0 0
    %955 = vmatmul.mubr.bf16.gmra.mrb[0].mxu0 %v920
    %v956 = vpop.f32.mrb[0].mxu0
    %v957 = vadd.f32 0.0, %v956
    %v958 = vpop.f32.mrb[0].mxu0
    %v959 = vpop.f32.mrb[0].mxu0
    %v960 = vpop.f32.mrb[0].mxu0
    %961 = vdwg.mxu0
    %v962 = vadd.f32 %v399, %v957
    %v963 = vxor.u32 %v962, 2147483648
    %v964 = vmul.f32 %v963, 1.442695
    %v965 = vpow.pop %v964
    %v966 = vadd.f32 %v965, 1.0
    %v967 = vrcp.pop %v966
    %v968 = vmul.f32 1.0, %v967
    %v969 = vmul.f32 %v968, 2.0
    %v970 = vsub.f32 %v969, 1.0
    %v971 = vmul.f32 %v968, %v912
    %973 = vrot.lane.b32.xlu0 %v970, 64
    %v974 = vpop.permute.xlu0 %973
    %v976 = vmul.f32 %v968, %v974
    %978 = vrot.lane.b32.xlu0 %v976, 32
    %v979 = vpop.permute.xlu0 %978
    %v981 = vadd.f32 %v971, %v979
    %v982 = vtanh.pop %v981
    %984 = vrot.lane.b32.xlu0 %v982, 64
    %v985 = vpop.permute.xlu0 %984
    %v987 = vmul.f32 %v968, %v985
    %vm988 = vcmp.lt.f32.partialorder 6.0, %v409
    %v989 = vsel %vm988, 1, 0
    %990 = vset.pattern.permute.xlu0 0
    %991 = vperm.xlu0 %990, %v989
    %v992 = vpop.permute.xlu0 %991
    %vm993 = vcmp.eq.s32.totalorder %v992, 1
    %v994 = vsel %vm993, %v987, %v911
    %v995 = vsel %vm993, %v981, %v912
    %v996 = vsel %vm993, %v987, 0.0
    %v997 = vadd.f32 %v914, %v996
    %v998 = vpack.c.bf16 %v994, %v994
    %1000 = vrot.lane.b32.xlu0 %v998, 32
    %v1001 = vpop.permute.xlu0 %1000
    %v1003 = vsel %vm327, %v1001, 0
    %1005 = vmatprep.subr.bf16.mxu0 0
    %1006 = vmatpush1.bf16.msra.mxu0 %v418
    %1007 = vmatprep.subr.bf16.mxu0 0
    %1008 = vmatpush1.bf16.msra.mxu0 %v419
    %1009 = vmatprep.subr.bf16.mxu0 0
    %1010 = vmatpush1.bf16.msra.mxu0 0
    %1011 = vmatprep.subr.bf16.mxu0 0
    %1012 = vmatpush1.bf16.msra.mxu0 0
    %1013 = vmatprep.subr.bf16.mxu0 0
    %1014 = vmatpush1.bf16.msra.mxu0 0
    %1015 = vmatprep.subr.bf16.mxu0 0
    %1016 = vmatpush1.bf16.msra.mxu0 0
    %1017 = vmatprep.subr.bf16.mxu0 0
    %1018 = vmatpush1.bf16.msra.mxu0 0
    %1019 = vmatprep.subr.bf16.mxu0 0
    %1020 = vmatpush1.bf16.msra.mxu0 0
    %1021 = vmatprep.subr.bf16.mxu0 0
    %1022 = vmatpush1.bf16.msra.mxu0 0
    %1023 = vmatprep.subr.bf16.mxu0 0
    %1024 = vmatpush1.bf16.msra.mxu0 0
    %1025 = vmatprep.subr.bf16.mxu0 0
    %1026 = vmatpush1.bf16.msra.mxu0 0
    %1027 = vmatprep.subr.bf16.mxu0 0
    %1028 = vmatpush1.bf16.msra.mxu0 0
    %1029 = vmatprep.subr.bf16.mxu0 0
    %1030 = vmatpush1.bf16.msra.mxu0 0
    %1031 = vmatprep.subr.bf16.mxu0 0
    %1032 = vmatpush1.bf16.msra.mxu0 0
    %1033 = vmatprep.subr.bf16.mxu0 0
    %1034 = vmatpush1.bf16.msra.mxu0 0
    %1035 = vmatprep.subr.bf16.mxu0 0
    %1036 = vmatpush1.bf16.msra.mxu0 0
    %1037 = vmatprep.mubr.bf16.mxu0 0
    %1038 = vmatmul.mubr.bf16.gmra.mrb[0].mxu0 %v1003
    %v1039 = vpop.f32.mrb[0].mxu0
    %v1040 = vadd.f32 0.0, %v1039
    %v1041 = vpop.f32.mrb[0].mxu0
    %v1042 = vpop.f32.mrb[0].mxu0
    %v1043 = vpop.f32.mrb[0].mxu0
    %1044 = vdwg.mxu0
    %v1045 = vadd.f32 %v402, %v1040
    %v1046 = vxor.u32 %v1045, 2147483648
    %v1047 = vmul.f32 %v1046, 1.442695
    %v1048 = vpow.pop %v1047
    %v1049 = vadd.f32 %v1048, 1.0
    %v1050 = vrcp.pop %v1049
    %v1051 = vmul.f32 1.0, %v1050
    %v1052 = vmul.f32 %v1051, 2.0
    %v1053 = vsub.f32 %v1052, 1.0
    %v1054 = vmul.f32 %v1051, %v995
    %1056 = vrot.lane.b32.xlu0 %v1053, 64
    %v1057 = vpop.permute.xlu0 %1056
    %v1059 = vmul.f32 %v1051, %v1057
    %1061 = vrot.lane.b32.xlu0 %v1059, 32
    %v1062 = vpop.permute.xlu0 %1061
    %v1064 = vadd.f32 %v1054, %v1062
    %v1065 = vtanh.pop %v1064
    %1067 = vrot.lane.b32.xlu0 %v1065, 64
    %v1068 = vpop.permute.xlu0 %1067
    %v1070 = vmul.f32 %v1051, %v1068
    %vm1071 = vcmp.lt.f32.partialorder 7.0, %v409
    %v1072 = vsel %vm1071, 1, 0
    %1073 = vset.pattern.permute.xlu0 0
    %1074 = vperm.xlu0 %1073, %v1072
    %v1075 = vpop.permute.xlu0 %1074
    %vm1076 = vcmp.eq.s32.totalorder %v1075, 1
    %v1077 = vsel %vm1076, %v1070, 0.0
    %v1078 = vadd.f32 %v997, %v1077
    %v1079 = vmax.f32 %v409, 1.0
    %v1080 = vrcp.pop %v1079
    %1082 = vset.pattern.permute.xlu0 0
    %1083 = vperm.xlu0 %1082, %v1080
    %v1084 = vpop.permute.xlu0 %1083
    %v1086 = vmul.f32 %v1078, %v1084
    %1088 = vrot.lane.b32.xlu0 %v1086, 32
    %v1089 = vpop.permute.xlu0 %1088
    %vm1091 = vcmask 254976
    %1092 = vst.msk [vmem:[#allocation2] sm:$0x3] %vm1091, %v1089
    // Predicated region
    $region34: #{lstm_skeleton_forward.1} parent=1 // pred_check
      _
    $region35: #{lstm_skeleton_forward.1} parent=1 // pred_check_branch
      %1094 = sbr.rel (0) target = $region37
    $region36: #{lstm_skeleton_forward.1} parent=1 // pred_region
      %s1096 = ssub.s32 32, 32
      %1097 = vsyncadd [#allocation3], %s1096
      %s1099 = sshll.u32 [#allocation2], 4
      %s1100 = int_to_ptr.vmem [resolvable:$true] %s1099
      %1102 = dma.vmem_to_hbm [thread:$0]  %s1100, 32, %s8, [#allocation3]
    $region37: #{lstm_skeleton_forward.1} parent=1 // pred_fallthru
      _
    // Predicated region
    $region38: #{lstm_skeleton_forward.1} parent=1 // pred_check
      _
    $region39: #{lstm_skeleton_forward.1} parent=1 // pred_check_branch
      %1104 = sbr.rel (0) target = $region41
    $region40: #{lstm_skeleton_forward.1} parent=1 // pred_region
      %1105 = dma.done [#allocation3], 32
    $region41: #{lstm_skeleton_forward.1} parent=1 // pred_fallthru
      _
    %1106 = vsyncpa [#allocation3], 1

</llo_original>
